<compile_context>
chip_gen: v7x
topology: tpu7x:2x2x1
jax: 0.10.0
libtpu: 0.0.40
codegen_flags: <defaults>
</compile_context>

<pallas_src>
import jax
import jax.numpy as jnp
from jax.experimental import pallas as pl
from jax.experimental.pallas import tpu as pltpu

EPS = 1e-8  # torch.cosine_similarity default eps


def _round_up(x, m):
    return ((x + m - 1) // m) * m


def ntn_kernel(x1_ref, x2_ref, w1_ref, w2_ref, seg_ref, b_ref, out_ref):
    x1 = x1_ref[...]                    # (tb, D)      compute dtype (bf16/f32)
    x2 = x2_ref[...]                    # (tb, D)
    w1 = w1_ref[...]                    # (D, K*D + K) [W1 folded | V1]
    w2 = w2_ref[...]                    # (D, K*D + K) [W2 folded | V2]
    seg = seg_ref[...]                  # (K*D, K)     block indicator, f32
    b = b_ref[...]                      # (1, K)       f32

    kd = seg_ref.shape[0]               # K*D (static)
    tb = x1_ref.shape[0]                # batch tile (static)

    # Fused projections: projections for all K slices AND the V contribution
    # come out of one MXU matmul per input (f32 accumulation).
    p1 = jnp.dot(x1, w1, preferred_element_type=jnp.float32)   # (tb, K*D + K)
    p2 = jnp.dot(x2, w2, preferred_element_type=jnp.float32)   # (tb, K*D + K)

    x1t = p1[:, :kd]                    # (tb, K*D)  f32
    x2t = p2[:, :kd]                    # (tb, K*D)  f32
    part2 = p1[:, kd:] + p2[:, kd:]     # (tb, K)    = concat([x1,x2]) @ V

    # Per-K segment reductions, fused into ONE lane-dense MXU matmul:
    #   r[0:tb]      = sum_e x1t*x2t over each D-wide group  -> dot
    #   r[tb:2tb]    = sum_e x1t*x1t                          -> |x1t|^2
    #   r[2tb:3tb]   = sum_e x2t*x2t                          -> |x2t|^2
    L = jnp.concatenate([x1t * x2t, x1t * x1t, x2t * x2t], axis=0)  # (3tb,K*D)
    r = jnp.dot(L, seg, preferred_element_type=jnp.float32)         # (3tb, K)
    dot = r[0 * tb:1 * tb]
    s1 = r[1 * tb:2 * tb]
    s2 = r[2 * tb:3 * tb]

    # cosine similarity: dot / max(||x1t||*||x2t||, EPS).  sqrt(s1)*sqrt(s2)
    # avoids overflowing f32 with the product of squared norms.
    denom = jnp.maximum(jnp.sqrt(s1) * jnp.sqrt(s2), EPS)
    part1 = dot / denom

    fea = part1 + part2 + b
    out_ref[...] = jnp.maximum(fea, 0.0).astype(out_ref.dtype)


def prepare_ntn_params(W1, W2, V, b, *, compute_dtype=jnp.bfloat16):
    """One-time parameter prep (hoisted out of the per-call forward path).

    W1, W2: (K, D, D); V: (K, 2D, 1); b: (K,).
    """
    K, D, _ = W1.shape
    # Fold K into the matmul N dimension: (K, D, D) -> (D, K, D) -> (D, K*D).
    w1f = jnp.transpose(W1, (1, 0, 2)).reshape(D, K * D)
    w2f = jnp.transpose(W2, (1, 0, 2)).reshape(D, K * D)
    # Split + transpose V so part2 = x1 @ V1 + x2 @ V2 (no in-kernel concat).
    v2d = V.reshape(K, 2 * D)
    v1 = jnp.transpose(v2d[:, :D])      # (D, K)
    v2 = jnp.transpose(v2d[:, D:])      # (D, K)
    # Fold V columns onto the projection weights: part2 comes for free out of
    # the projection matmuls.
    w1_ext = jnp.concatenate([w1f, v1], axis=1).astype(compute_dtype)
    w2_ext = jnp.concatenate([w2f, v2], axis=1).astype(compute_dtype)
    # Constant block indicator seg[k*D + e, k] = 1 -> segment sums on the MXU
    # (kept f32: it multiplies the f32 x1t/x2t products).
    seg = (jnp.arange(K * D)[:, None] // D ==
           jnp.arange(K)[None, :]).astype(jnp.float32)
    b2d = b.reshape(1, K).astype(jnp.float32)
    return dict(w1_ext=w1_ext, w2_ext=w2_ext, seg=seg, b=b2d,
                compute_dtype=compute_dtype)


def ntn_forward(x1, x2, params, *, tb=None):
    """x1, x2: (B, D) float32; params from prepare_ntn_params()."""
    B, D = x1.shape
    w1_ext, w2_ext = params["w1_ext"], params["w2_ext"]
    seg, b2d = params["seg"], params["b"]
    KD, K = seg.shape
    NE = w1_ext.shape[1]                # K*D + K
    cdt = params["compute_dtype"]

    # Cast activations to the compute dtype wrapper-side (halves HBM traffic
    # and enables single-pass bf16 MXU matmuls; accumulation stays f32).
    x1c = x1.astype(cdt)
    x2c = x2.astype(cdt)

    # Batch tile: >= 2 grid steps for B > 16 (v7x has 2 TensorCores to shard
    # the parallel axis), capped at 256 so per-step f32 intermediates stay well
    # inside v5e's 16 MiB scoped-VMEM default.
    if tb is None:
        if B <= 16:
            tb = _round_up(B, 8)
        else:
            tb = min(256, _round_up(pl.cdiv(B, 2), 8))
    tb = min(tb, _round_up(B, 8))
    grid = (pl.cdiv(B, tb),)

    bcast = lambda i: (0, 0)
    # NOTE: at larger D/K, mark the grid-invariant weight inputs with
    # pipeline_mode=pl.Buffered(1) to avoid double-buffering them in VMEM.
    return pl.pallas_call(
        ntn_kernel,
        out_shape=jax.ShapeDtypeStruct((B, K), jnp.float32),
        grid=grid,
        in_specs=[
            pl.BlockSpec((tb, D), lambda i: (i, 0)),   # x1
            pl.BlockSpec((tb, D), lambda i: (i, 0)),   # x2
            pl.BlockSpec((D, NE), bcast),              # [W1 folded | V1]
            pl.BlockSpec((D, NE), bcast),              # [W2 folded | V2]
            pl.BlockSpec((KD, K), bcast),              # segment indicator
            pl.BlockSpec((1, K), bcast),               # bias
        ],
        out_specs=pl.BlockSpec((tb, K), lambda i: (i, 0)),
        compiler_params=pltpu.CompilerParams(
            dimension_semantics=("parallel",)),
    )(x1c, x2c, w1_ext, w2_ext, seg, b2d)


def ntn_reference(x1, x2, W1, W2, V, b):
    """Pure-JAX reference mirroring the PyTorch loop (for sanity checking)."""
    K = W1.shape[0]
    cols = []
    for i in range(K):
        x1t = x1 @ W1[i]
        x2t = x2 @ W2[i]
        dot = jnp.sum(x1t * x2t, axis=-1)
        n1 = jnp.linalg.norm(x1t, axis=-1)
        n2 = jnp.linalg.norm(x2t, axis=-1)
        part1 = dot / jnp.maximum(n1 * n2, EPS)
        xc = jnp.concatenate([x1, x2], axis=-1)
        part2 = (xc @ V[i])[:, 0]
        cols.append(part1 + part2 + b[i])
    return jax.nn.relu(jnp.stack(cols, axis=-1))


def xavier_normal(key, shape):
    # PyTorch xavier_normal_ for a (K, fan_in_dim, receptive...) tensor.
    receptive = 1
    for s in shape[2:]:
        receptive *= s
    fan_in = shape[1] * receptive
    fan_out = shape[0] * receptive
    std = (2.0 / (fan_in + fan_out)) ** 0.5
    return std * jax.random.normal(key, shape, dtype=jnp.float32)


if __name__ == "__main__":
    # Small shapes consistent with the module: input_dim=D, feature_map_dim=K.
    # B=64 exercises the multi-step parallel grid (tb=32 -> grid=(2,)).
    B, D, K = 64, 32, 16

    key = jax.random.PRNGKey(0)
    k_x1, k_x2, k_v, k_w1, k_w2 = jax.random.split(key, 5)

    x1 = jax.random.normal(k_x1, (B, D), dtype=jnp.float32)
    x2 = jax.random.normal(k_x2, (B, D), dtype=jnp.float32)

    V = xavier_normal(k_v, (K, 2 * D, 1))
    W1 = xavier_normal(k_w1, (K, D, D))
    W2 = xavier_normal(k_w2, (K, D, D))
    b = jnp.zeros((K,), dtype=jnp.float32)

    # --- f32 compute path: exact check against the reference ----------------
    params_f32 = prepare_ntn_params(W1, W2, V, b, compute_dtype=jnp.float32)
    out_f32 = jax.block_until_ready(ntn_forward(x1, x2, params_f32))
    ref_f32 = ntn_reference(x1, x2, W1, W2, V, b)
    assert out_f32.shape == (B, K), out_f32.shape
    assert jnp.allclose(out_f32, ref_f32, atol=1e-4, rtol=1e-4), \
        "f32 path mismatch vs reference"

    # --- bf16 compute path (default / recommended on v6e & v7x) -------------
    # Compare against the reference evaluated on bf16-rounded operands so the
    # check isolates kernel math (both sides accumulate in f32).
    params_bf16 = prepare_ntn_params(W1, W2, V, b, compute_dtype=jnp.bfloat16)
    out_bf16 = jax.block_until_ready(ntn_forward(x1, x2, params_bf16))

    def rnd(a):
        return a.astype(jnp.bfloat16).astype(jnp.float32)

    ref_bf16 = ntn_reference(rnd(x1), rnd(x2), rnd(W1), rnd(W2), rnd(V), b)
    assert out_bf16.shape == (B, K), out_bf16.shape
    assert jnp.allclose(out_bf16, ref_bf16, atol=5e-3, rtol=5e-3), \
        "bf16 path mismatch vs (bf16-rounded) reference"

    print("KERNEL_OK")
</pallas_src>

<mosaic_0001>
module attributes {stable_mosaic.version = 11 : i64} {
  func.func @ntn_kernel(%arg0: i32, %arg1: memref<32x32xf32, #tpu.memory_space<vmem>>, %arg2: memref<32x32xf32, #tpu.memory_space<vmem>>, %arg3: memref<32x528xf32, #tpu.memory_space<vmem>>, %arg4: memref<32x528xf32, #tpu.memory_space<vmem>>, %arg5: memref<512x16xf32, #tpu.memory_space<vmem>>, %arg6: memref<1x16xf32, #tpu.memory_space<vmem>>, %arg7: memref<32x16xf32, #tpu.memory_space<vmem>>) attributes {dimension_semantics = [#tpu.dimension_semantics<parallel>], iteration_bounds = array<i64: 2>, scalar_prefetch = 0 : i64, scratch_operands = 0 : i64, tpu.core_type = #tpu.core_type<tc>, window_params = [{transform_indices = @transform_0, window_bounds = array<i64: 32, 32>}, {transform_indices = @transform_1, window_bounds = array<i64: 32, 32>}, {pipeline_mode = #tpu.pipeline_mode<synchronous>, transform_indices = @transform_2, window_bounds = array<i64: 32, 528>}, {pipeline_mode = #tpu.pipeline_mode<synchronous>, transform_indices = @transform_3, window_bounds = array<i64: 32, 528>}, {pipeline_mode = #tpu.pipeline_mode<synchronous>, transform_indices = @transform_4, window_bounds = array<i64: 512, 16>}, {pipeline_mode = #tpu.pipeline_mode<synchronous>, transform_indices = @transform_5, window_bounds = array<i64: 1, 16>}, {transform_indices = @transform_6, window_bounds = array<i64: 32, 16>}]} {
    %c0 = arith.constant 0 : index
    %c0_0 = arith.constant 0 : index
    %0 = vector.load %arg1[%c0, %c0_0] : memref<32x32xf32, #tpu.memory_space<vmem>>, vector<32x32xf32>
    %c0_1 = arith.constant 0 : index
    %c0_2 = arith.constant 0 : index
    %1 = vector.load %arg2[%c0_1, %c0_2] : memref<32x32xf32, #tpu.memory_space<vmem>>, vector<32x32xf32>
    %c0_3 = arith.constant 0 : index
    %c0_4 = arith.constant 0 : index
    %2 = vector.load %arg3[%c0_3, %c0_4] : memref<32x528xf32, #tpu.memory_space<vmem>>, vector<32x528xf32>
    %c0_5 = arith.constant 0 : index
    %c0_6 = arith.constant 0 : index
    %3 = vector.load %arg4[%c0_5, %c0_6] : memref<32x528xf32, #tpu.memory_space<vmem>>, vector<32x528xf32>
    %c0_7 = arith.constant 0 : index
    %c0_8 = arith.constant 0 : index
    %4 = vector.load %arg5[%c0_7, %c0_8] : memref<512x16xf32, #tpu.memory_space<vmem>>, vector<512x16xf32>
    %c0_9 = arith.constant 0 : index
    %c0_10 = arith.constant 0 : index
    %5 = vector.load %arg6[%c0_9, %c0_10] : memref<1x16xf32, #tpu.memory_space<vmem>>, vector<1x16xf32>
    %cst = arith.constant dense<0.000000e+00> : vector<32x528xf32>
    %6 = tpu.matmul %0, %2, %cst {dimension_numbers = #tpu.dot_dimension_numbers<[1], [0], [0], [1], [0, 0, 1, 1], [], []>} : vector<32x32xf32>, vector<32x528xf32>, vector<32x528xf32> -> vector<32x528xf32>
    %cst_11 = arith.constant dense<0.000000e+00> : vector<32x528xf32>
    %7 = tpu.matmul %1, %3, %cst_11 {dimension_numbers = #tpu.dot_dimension_numbers<[1], [0], [0], [1], [0, 0, 1, 1], [], []>} : vector<32x32xf32>, vector<32x528xf32>, vector<32x528xf32> -> vector<32x528xf32>
    %8 = vector.extract_strided_slice %6 {offsets = [0, 0], sizes = [32, 512], strides = [1, 1]} : vector<32x528xf32> to vector<32x512xf32>
    %9 = vector.extract_strided_slice %7 {offsets = [0, 0], sizes = [32, 512], strides = [1, 1]} : vector<32x528xf32> to vector<32x512xf32>
    %10 = vector.extract_strided_slice %6 {offsets = [0, 512], sizes = [32, 16], strides = [1, 1]} : vector<32x528xf32> to vector<32x16xf32>
    %11 = vector.extract_strided_slice %7 {offsets = [0, 512], sizes = [32, 16], strides = [1, 1]} : vector<32x528xf32> to vector<32x16xf32>
    %12 = arith.addf %10, %11 : vector<32x16xf32>
    %13 = arith.mulf %8, %9 : vector<32x512xf32>
    %14 = arith.mulf %8, %8 : vector<32x512xf32>
    %15 = arith.mulf %9, %9 : vector<32x512xf32>
    %16 = tpu.concatenate %13, %14, %15 in 0 : vector<32x512xf32>, vector<32x512xf32>, vector<32x512xf32> -> vector<96x512xf32>
    %cst_12 = arith.constant dense<0.000000e+00> : vector<96x16xf32>
    %17 = tpu.matmul %16, %4, %cst_12 {dimension_numbers = #tpu.dot_dimension_numbers<[1], [0], [0], [1], [0, 0, 1, 1], [], []>} : vector<96x512xf32>, vector<512x16xf32>, vector<96x16xf32> -> vector<96x16xf32>
    %18 = vector.extract_strided_slice %17 {offsets = [0, 0], sizes = [32, 16], strides = [1, 1]} : vector<96x16xf32> to vector<32x16xf32>
    %19 = vector.extract_strided_slice %17 {offsets = [32, 0], sizes = [32, 16], strides = [1, 1]} : vector<96x16xf32> to vector<32x16xf32>
    %20 = vector.extract_strided_slice %17 {offsets = [64, 0], sizes = [32, 16], strides = [1, 1]} : vector<96x16xf32> to vector<32x16xf32>
    %21 = math.sqrt %19 : vector<32x16xf32>
    %22 = math.sqrt %20 : vector<32x16xf32>
    %23 = arith.mulf %21, %22 : vector<32x16xf32>
    %cst_13 = arith.constant 9.99999993E-9 : f32
    %24 = vector.broadcast %cst_13 : f32 to vector<32x16xf32>
    %25 = arith.maximumf %23, %24 : vector<32x16xf32>
    %26 = arith.divf %18, %25 : vector<32x16xf32>
    %27 = arith.addf %26, %12 : vector<32x16xf32>
    %28 = vector.broadcast %5 : vector<1x16xf32> to vector<32x16xf32>
    %29 = arith.addf %27, %28 : vector<32x16xf32>
    %cst_14 = arith.constant 0.000000e+00 : f32
    %30 = vector.broadcast %cst_14 : f32 to vector<32x16xf32>
    %31 = arith.maximumf %29, %30 : vector<32x16xf32>
    %c0_15 = arith.constant 0 : index
    %c0_16 = arith.constant 0 : index
    %32 = vector.load %arg7[%c0_15, %c0_16] : memref<32x16xf32, #tpu.memory_space<vmem>>, vector<32x16xf32>
    tpu.vector_store %arg7[%c0_15, %c0_16], %31 {strides = array<i32>} : memref<32x16xf32, #tpu.memory_space<vmem>>, vector<32x16xf32>,
    return
  }
  func.func @transform_0(%arg0: i32) -> (i32, i32) {
    %c0_i32 = arith.constant 0 : i32
    %c0_i32_0 = arith.constant 0 : i32
    return %arg0, %c0_i32 : i32, i32
  }
  func.func @transform_1(%arg0: i32) -> (i32, i32) {
    %c0_i32 = arith.constant 0 : i32
    %c0_i32_0 = arith.constant 0 : i32
    return %arg0, %c0_i32 : i32, i32
  }
  func.func @transform_2(%arg0: i32) -> (i32, i32) {
    %c0_i32 = arith.constant 0 : i32
    %c0_i32_0 = arith.constant 0 : i32
    %c0_i32_1 = arith.constant 0 : i32
    return %c0_i32, %c0_i32_0 : i32, i32
  }
  func.func @transform_3(%arg0: i32) -> (i32, i32) {
    %c0_i32 = arith.constant 0 : i32
    %c0_i32_0 = arith.constant 0 : i32
    %c0_i32_1 = arith.constant 0 : i32
    return %c0_i32, %c0_i32_0 : i32, i32
  }
  func.func @transform_4(%arg0: i32) -> (i32, i32) {
    %c0_i32 = arith.constant 0 : i32
    %c0_i32_0 = arith.constant 0 : i32
    %c0_i32_1 = arith.constant 0 : i32
    return %c0_i32, %c0_i32_0 : i32, i32
  }
  func.func @transform_5(%arg0: i32) -> (i32, i32) {
    %c0_i32 = arith.constant 0 : i32
    %c0_i32_0 = arith.constant 0 : i32
    %c0_i32_1 = arith.constant 0 : i32
    return %c0_i32, %c0_i32_0 : i32, i32
  }
  func.func @transform_6(%arg0: i32) -> (i32, i32) {
    %c0_i32 = arith.constant 0 : i32
    %c0_i32_0 = arith.constant 0 : i32
    return %arg0, %c0_i32 : i32, i32
  }
}

</mosaic_0001>

<llo_original>
// kernel: tpu_custom_call.1
$region0: #{tpu_custom_call.1}
  #allocation0 [shape = 'u32[]', space=smem, size = 0x4, offset = 0x4, fixed_abs, tag = 'smem constant byte address 0x4 - core index']
  #allocation1 [shape = 'u32[144,128]{1,0:T(1,128)}', space=vmem, size = 0x12000, scoped, tag = 'internal scratch']
  %s0 = inlined_call_operand.vmem [shape: f32[64,32], index: 0, kind: input, shape index: {}]
  %s1 = inlined_call_operand.vmem [shape: f32[64,32], index: 1, kind: input, shape index: {}]
  %s2 = inlined_call_operand.vmem [shape: f32[32,528], index: 2, kind: input, shape index: {}]
  %s3 = inlined_call_operand.vmem [shape: f32[32,528], index: 3, kind: input, shape index: {}]
  %s4 = inlined_call_operand.vmem [shape: f32[512,16], index: 4, kind: input, shape index: {}]
  %s5 = inlined_call_operand.vmem [shape: f32[1,16], index: 5, kind: input, shape index: {}]
  %s6 = inlined_call_operand.vmem [shape: f32[64,16], index: 6, kind: output, shape index: {}]
  %s7 = sld [smem:[#allocation0]]
  $region57: #{tpu_custom_call.1} parent=0
    _
  %s9 = ssub.s32 1, %s7
  %s10 = scalar_select 0, %s9, %s7
  loop: start=0, step=1, limit=4
  $region2: #{tpu_custom_call.1} parent=0 // loop_pre_header
    _
  $region3: #{tpu_custom_call.1} parent=0 // loop_header
    %s12 = sphi 0, %s16
    %p13 = scmp.ge.s32.totalorder %s12, 4
    %s22 = sphi 0, %s24
    %s25 = sphi 0, %s22
    %s26 = sphi 0, %s25
    %s42 = sphi 0, %s26
    %s48 = sphi 0, %s50
    %s51 = sphi 0, %s48
    %s52 = sphi 0, %s51
    %s68 = sphi 0, %s52
    %s72 = sphi 0, %s72
    %s74 = sphi 0, %s72
    %s75 = sphi 0, %s74
    %s89 = sphi 0, %s75
    %s93 = sphi 0, %s93
    %s95 = sphi 0, %s93
    %s96 = sphi 0, %s95
    %s110 = sphi 0, %s96
    %s114 = sphi 0, %s114
    %s116 = sphi 0, %s114
    %s117 = sphi 0, %s116
    %s131 = sphi 0, %s117
    %s135 = sphi 0, %s135
    %s137 = sphi 0, %s135
    %s138 = sphi 0, %s137
    %s152 = sphi 0, %s138
    %s158 = sphi 0, %s160
    %s161 = sphi 0, %s158
    %s162 = sphi 0, %s161
    %s178 = sphi 0, %s162
  $region4: #{tpu_custom_call.1} parent=0 // loop_header_branch
    %15 = sbr.rel (%p13) target = $region8
  $region5: #{tpu_custom_call.1} parent=0 // loop_body
    %s17 = ssub.s32 %s12, 1
    %s18 = ssub.s32 %s12, 2
    %s19 = sadd.s32 %s12, 1
    %s20 = ssub.s32 %s12, %s19
    %p21 = scmp.eq.s32.totalorder %s20, 0
    %s23 = sadd.s32 %s22, 1
    %s24 = scalar_select %p21, %s22, %s23
    %p27 = pneg %p21
    %p28 = scmp.eq.s32.totalorder %s12, 1
    %p29 = por %p27, %p28
    %p30 = scmp.ne.s32.totalorder %s22, %s25
    %p31 = scmp.eq.s32.totalorder %s12, 0
    %p32 = por %p30, %p31
    %p33 = scmp.ne.s32.totalorder %s22, %s25
    %p34 = scmp.eq.s32.totalorder %s17, 1
    %p35 = por %p33, %p34
    %p36 = scmp.ne.s32.totalorder %s25, %s26
    %p37 = scmp.eq.s32.totalorder %s17, 0
    %p38 = por %p36, %p37
    %p39 = scmp.ne.s32.totalorder %s25, %s26
    %p40 = scmp.eq.s32.totalorder %s18, 1
    %p41 = por %p39, %p40
    %p43 = scmp.ne.s32.totalorder %s26, %s42
    %p44 = scmp.eq.s32.totalorder %s18, 0
    %p45 = por %p43, %p44
    %s46 = ssub.s32 %s12, %s19
    %p47 = scmp.eq.s32.totalorder %s46, 0
    %s49 = sadd.s32 %s48, 1
    %s50 = scalar_select %p47, %s48, %s49
    %p53 = pneg %p47
    %p54 = scmp.eq.s32.totalorder %s12, 1
    %p55 = por %p53, %p54
    %p56 = scmp.ne.s32.totalorder %s48, %s51
    %p57 = scmp.eq.s32.totalorder %s12, 0
    %p58 = por %p56, %p57
    %p59 = scmp.ne.s32.totalorder %s48, %s51
    %p60 = scmp.eq.s32.totalorder %s17, 1
    %p61 = por %p59, %p60
    %p62 = scmp.ne.s32.totalorder %s51, %s52
    %p63 = scmp.eq.s32.totalorder %s17, 0
    %p64 = por %p62, %p63
    %p65 = scmp.ne.s32.totalorder %s51, %s52
    %p66 = scmp.eq.s32.totalorder %s18, 1
    %p67 = por %p65, %p66
    %p69 = scmp.ne.s32.totalorder %s52, %s68
    %p70 = scmp.eq.s32.totalorder %s18, 0
    %p71 = por %p69, %p70
    %s73 = sadd.s32 %s72, 1
    %p76 = scmp.eq.s32.totalorder %s12, 1
    %p77 = scmp.ne.s32.totalorder %s72, %s74
    %p78 = scmp.eq.s32.totalorder %s12, 0
    %p79 = por %p77, %p78
    %p80 = scmp.ne.s32.totalorder %s72, %s74
    %p81 = scmp.eq.s32.totalorder %s17, 1
    %p82 = por %p80, %p81
    %p83 = scmp.ne.s32.totalorder %s74, %s75
    %p84 = scmp.eq.s32.totalorder %s17, 0
    %p85 = por %p83, %p84
    %p86 = scmp.ne.s32.totalorder %s74, %s75
    %p87 = scmp.eq.s32.totalorder %s18, 1
    %p88 = por %p86, %p87
    %p90 = scmp.ne.s32.totalorder %s75, %s89
    %p91 = scmp.eq.s32.totalorder %s18, 0
    %p92 = por %p90, %p91
    %s94 = sadd.s32 %s93, 1
    %p97 = scmp.eq.s32.totalorder %s12, 1
    %p98 = scmp.ne.s32.totalorder %s93, %s95
    %p99 = scmp.eq.s32.totalorder %s12, 0
    %p100 = por %p98, %p99
    %p101 = scmp.ne.s32.totalorder %s93, %s95
    %p102 = scmp.eq.s32.totalorder %s17, 1
    %p103 = por %p101, %p102
    %p104 = scmp.ne.s32.totalorder %s95, %s96
    %p105 = scmp.eq.s32.totalorder %s17, 0
    %p106 = por %p104, %p105
    %p107 = scmp.ne.s32.totalorder %s95, %s96
    %p108 = scmp.eq.s32.totalorder %s18, 1
    %p109 = por %p107, %p108
    %p111 = scmp.ne.s32.totalorder %s96, %s110
    %p112 = scmp.eq.s32.totalorder %s18, 0
    %p113 = por %p111, %p112
    %s115 = sadd.s32 %s114, 1
    %p118 = scmp.eq.s32.totalorder %s12, 1
    %p119 = scmp.ne.s32.totalorder %s114, %s116
    %p120 = scmp.eq.s32.totalorder %s12, 0
    %p121 = por %p119, %p120
    %p122 = scmp.ne.s32.totalorder %s114, %s116
    %p123 = scmp.eq.s32.totalorder %s17, 1
    %p124 = por %p122, %p123
    %p125 = scmp.ne.s32.totalorder %s116, %s117
    %p126 = scmp.eq.s32.totalorder %s17, 0
    %p127 = por %p125, %p126
    %p128 = scmp.ne.s32.totalorder %s116, %s117
    %p129 = scmp.eq.s32.totalorder %s18, 1
    %p130 = por %p128, %p129
    %p132 = scmp.ne.s32.totalorder %s117, %s131
    %p133 = scmp.eq.s32.totalorder %s18, 0
    %p134 = por %p132, %p133
    %s136 = sadd.s32 %s135, 1
    %p139 = scmp.eq.s32.totalorder %s12, 1
    %p140 = scmp.ne.s32.totalorder %s135, %s137
    %p141 = scmp.eq.s32.totalorder %s12, 0
    %p142 = por %p140, %p141
    %p143 = scmp.ne.s32.totalorder %s135, %s137
    %p144 = scmp.eq.s32.totalorder %s17, 1
    %p145 = por %p143, %p144
    %p146 = scmp.ne.s32.totalorder %s137, %s138
    %p147 = scmp.eq.s32.totalorder %s17, 0
    %p148 = por %p146, %p147
    %p149 = scmp.ne.s32.totalorder %s137, %s138
    %p150 = scmp.eq.s32.totalorder %s18, 1
    %p151 = por %p149, %p150
    %p153 = scmp.ne.s32.totalorder %s138, %s152
    %p154 = scmp.eq.s32.totalorder %s18, 0
    %p155 = por %p153, %p154
    %s156 = ssub.s32 %s12, %s19
    %p157 = scmp.eq.s32.totalorder %s156, 0
    %s159 = sadd.s32 %s158, 1
    %s160 = scalar_select %p157, %s158, %s159
    %p163 = pneg %p157
    %p164 = scmp.eq.s32.totalorder %s12, 1
    %p165 = por %p163, %p164
    %p166 = scmp.ne.s32.totalorder %s158, %s161
    %p167 = scmp.eq.s32.totalorder %s12, 0
    %p168 = por %p166, %p167
    %p169 = scmp.ne.s32.totalorder %s158, %s161
    %p170 = scmp.eq.s32.totalorder %s17, 1
    %p171 = por %p169, %p170
    %p172 = scmp.ne.s32.totalorder %s161, %s162
    %p173 = scmp.eq.s32.totalorder %s17, 0
    %p174 = por %p172, %p173
    %p175 = scmp.ne.s32.totalorder %s161, %s162
    %p176 = scmp.eq.s32.totalorder %s18, 1
    %p177 = por %p175, %p176
    %p179 = scmp.ne.s32.totalorder %s162, %s178
    %p180 = scmp.eq.s32.totalorder %s18, 0
    %p181 = por %p179, %p180
    %p182 = scmp.le.s32.totalorder 1, %s12
    %p183 = scmp.lt.s32.totalorder %s12, 3
    %p184 = pnand %p182, %p183
    %p185 = pneg %p184
    // Predicated region
    $region9: #{tpu_custom_call.1} parent=5 // pred_check
      _
    $region10: #{tpu_custom_call.1} parent=5 // pred_check_branch
      %187 = sbr.rel (%p184) target = $region12
    $region11: #{tpu_custom_call.1} parent=5 // pred_region
      %s188 = ssub.s32 %s12, 1
      // Predicated region
      $region13: #{tpu_custom_call.1} parent=11 // pred_check
        %p189 = pneg %p85
      $region14: #{tpu_custom_call.1} parent=11 // pred_check_branch
        %191 = sbr.rel (%p189) target = $region16
      $region15: #{tpu_custom_call.1} parent=11 // pred_region
        _
      $region16: #{tpu_custom_call.1} parent=11 // pred_fallthru
        _
      // Predicated region
      $region17: #{tpu_custom_call.1} parent=11 // pred_check
        %p192 = pneg %p106
      $region18: #{tpu_custom_call.1} parent=11 // pred_check_branch
        %194 = sbr.rel (%p192) target = $region20
      $region19: #{tpu_custom_call.1} parent=11 // pred_region
        _
      $region20: #{tpu_custom_call.1} parent=11 // pred_fallthru
        _
      // Predicated region
      $region21: #{tpu_custom_call.1} parent=11 // pred_check
        %p195 = pneg %p127
      $region22: #{tpu_custom_call.1} parent=11 // pred_check_branch
        %197 = sbr.rel (%p195) target = $region24
      $region23: #{tpu_custom_call.1} parent=11 // pred_region
        _
      $region24: #{tpu_custom_call.1} parent=11 // pred_fallthru
        _
      // Predicated region
      $region25: #{tpu_custom_call.1} parent=11 // pred_check
        %p198 = pneg %p148
      $region26: #{tpu_custom_call.1} parent=11 // pred_check_branch
        %200 = sbr.rel (%p198) target = $region28
      $region27: #{tpu_custom_call.1} parent=11 // pred_region
        _
      $region28: #{tpu_custom_call.1} parent=11 // pred_fallthru
        _
    $region12: #{tpu_custom_call.1} parent=5 // pred_fallthru
      _
    %p201 = scmp.lt.s32.totalorder %s12, 2
    // Predicated region
    $region29: #{tpu_custom_call.1} parent=5 // pred_check
      %p202 = pneg %p201
    $region30: #{tpu_custom_call.1} parent=5 // pred_check_branch
      %204 = sbr.rel (%p202) target = $region32
    $region31: #{tpu_custom_call.1} parent=5 // pred_region
      // Predicated region
      $region33: #{tpu_custom_call.1} parent=31 // pred_check
        %p205 = pneg %p32
      $region34: #{tpu_custom_call.1} parent=31 // pred_check_branch
        %207 = sbr.rel (%p205) target = $region36
      $region35: #{tpu_custom_call.1} parent=31 // pred_region
        %s208 = smul.u32 4, %s12
        %p209 = scmp.lt.s32.totalorder %s208, 7
        %s210 = scalar_select %p209, %s208, 7
        %s211 = smul.addr %s210, 8
        %s212 = scalar_lea.vmem %s0, %s211
        %s213 = smul.u32 4, %s12
      $region36: #{tpu_custom_call.1} parent=31 // pred_fallthru
        _
      // Predicated region
      $region37: #{tpu_custom_call.1} parent=31 // pred_check
        %p214 = pneg %p58
      $region38: #{tpu_custom_call.1} parent=31 // pred_check_branch
        %216 = sbr.rel (%p214) target = $region40
      $region39: #{tpu_custom_call.1} parent=31 // pred_region
        %s217 = smul.u32 4, %s12
        %p218 = scmp.lt.s32.totalorder %s217, 7
        %s219 = scalar_select %p218, %s217, 7
        %s220 = smul.addr %s219, 8
        %s221 = scalar_lea.vmem %s1, %s220
        %s222 = smul.u32 4, %s12
      $region40: #{tpu_custom_call.1} parent=31 // pred_fallthru
        _
    $region32: #{tpu_custom_call.1} parent=5 // pred_fallthru
      _
    %p223 = scmp.le.s32.totalorder 1, %s12
    %p224 = scmp.lt.s32.totalorder %s12, 3
    %p225 = pnand %p223, %p224
    %p226 = pneg %p225
    // Predicated region
    $region41: #{tpu_custom_call.1} parent=5 // pred_check
      _
    $region42: #{tpu_custom_call.1} parent=5 // pred_check_branch
      %228 = sbr.rel (%p225) target = $region44
    $region43: #{tpu_custom_call.1} parent=5 // pred_region
      %s229 = ssub.s32 %s12, 1
      %s230 = smul.u32 4, %s17
      %p231 = scmp.lt.s32.totalorder %s230, 7
      %s232 = scalar_select %p231, %s230, 7
      %s233 = smul.addr %s232, 8
      %s234 = scalar_lea.vmem %s0, %s233
      %p235 = pneg %p38
      %p236 = pneg %p35
      %s237 = smul.u32 4, %s17
      %p238 = scmp.lt.s32.totalorder %s237, 7
      %s239 = scalar_select %p238, %s237, 7
      %s240 = smul.addr %s239, 8
      %s241 = scalar_lea.vmem %s1, %s240
      %p242 = pneg %p64
      %p243 = pneg %p61
      %p244 = pneg %p85
      %p245 = pneg %p82
      %p246 = pneg %p106
      %p247 = pneg %p103
      %p248 = pneg %p127
      %p249 = pneg %p124
      %p250 = pneg %p148
      %p251 = pneg %p145
      %p252 = pneg %p174
      %p253 = pneg %p171
      %s254 = smul.u32 4, %s17
      %p255 = scmp.lt.s32.totalorder %s254, 7
      %s256 = scalar_select %p255, %s254, 7
      %s257 = smul.addr %s256, 8
      %s258 = scalar_lea.vmem %s6, %s257
      %s259 = smul.u32 4, %s17
      %p260 = scmp.lt.s32.totalorder %s259, 7
      %s261 = scalar_select %p260, %s259, 7
      %s262 = smul.addr %s261, 8
      %s263 = scalar_lea.vmem %s0, %s262
      %s264 = smul.u32 4, %s17
      %s265 = smul.u32 4, %s17
      %p266 = scmp.lt.s32.totalorder %s265, 7
      %s267 = scalar_select %p266, %s265, 7
      %s268 = smul.addr %s267, 8
      %s269 = scalar_lea.vmem %s1, %s268
      %s270 = smul.u32 4, %s17
      %s271 = smul.u32 4, %s17
      %p272 = scmp.lt.s32.totalorder %s271, 7
      %s273 = scalar_select %p272, %s271, 7
      %s274 = smul.addr %s273, 8
      %s275 = scalar_lea.vmem %s6, %s274
      %s276 = smul.u32 4, %s17
      %v277 = vld [vmem:[%s263] sm:$0xff]
      %v278 = vld [vmem:[%s263 + $0x8] sm:$0xff]
      %v279 = vld [vmem:[%s263 + $0x10] sm:$0xff]
      %v280 = vld [vmem:[%s263 + $0x18] sm:$0xff]
      %v281 = vld [vmem:[%s269] sm:$0xff]
      %v282 = vld [vmem:[%s269 + $0x8] sm:$0xff]
      %v283 = vld [vmem:[%s269 + $0x10] sm:$0xff]
      %v284 = vld [vmem:[%s269 + $0x18] sm:$0xff]
      %v285 = vld [vmem:[%s2] sm:$0xff]
      %v286 = vld [vmem:[%s2 + $0x8] sm:$0xff]
      %v287 = vld [vmem:[%s2 + $0x10] sm:$0xff]
      %v288 = vld [vmem:[%s2 + $0x18] sm:$0xff]
      %v289 = vld [vmem:[%s2 + $0x20] sm:$0xff]
      %v290 = vld [vmem:[%s2 + $0x28] sm:$0xff]
      %v291 = vld [vmem:[%s2 + $0x30] sm:$0xff]
      %v292 = vld [vmem:[%s2 + $0x38] sm:$0xff]
      %v293 = vld [vmem:[%s2 + $0x40] sm:$0xff]
      %v294 = vld [vmem:[%s2 + $0x48] sm:$0xff]
      %v295 = vld [vmem:[%s2 + $0x50] sm:$0xff]
      %v296 = vld [vmem:[%s2 + $0x58] sm:$0xff]
      %v297 = vld [vmem:[%s2 + $0x60] sm:$0xff]
      %v298 = vld [vmem:[%s2 + $0x68] sm:$0xff]
      %v299 = vld [vmem:[%s2 + $0x70] sm:$0xff]
      %v300 = vld [vmem:[%s2 + $0x78] sm:$0xff]
      %v301 = vld [vmem:[%s2 + $0x80] sm:$0xff]
      %v302 = vld [vmem:[%s2 + $0x88] sm:$0xff]
      %v303 = vld [vmem:[%s2 + $0x90] sm:$0xff]
      %v304 = vld [vmem:[%s2 + $0x98] sm:$0xff]
      %v305 = vld [vmem:[%s3] sm:$0xff]
      %v306 = vld [vmem:[%s3 + $0x8] sm:$0xff]
      %v307 = vld [vmem:[%s3 + $0x10] sm:$0xff]
      %v308 = vld [vmem:[%s3 + $0x18] sm:$0xff]
      %v309 = vld [vmem:[%s3 + $0x20] sm:$0xff]
      %v310 = vld [vmem:[%s3 + $0x28] sm:$0xff]
      %v311 = vld [vmem:[%s3 + $0x30] sm:$0xff]
      %v312 = vld [vmem:[%s3 + $0x38] sm:$0xff]
      %v313 = vld [vmem:[%s3 + $0x40] sm:$0xff]
      %v314 = vld [vmem:[%s3 + $0x48] sm:$0xff]
      %v315 = vld [vmem:[%s3 + $0x50] sm:$0xff]
      %v316 = vld [vmem:[%s3 + $0x58] sm:$0xff]
      %v317 = vld [vmem:[%s3 + $0x60] sm:$0xff]
      %v318 = vld [vmem:[%s3 + $0x68] sm:$0xff]
      %v319 = vld [vmem:[%s3 + $0x70] sm:$0xff]
      %v320 = vld [vmem:[%s3 + $0x78] sm:$0xff]
      %v321 = vld [vmem:[%s3 + $0x80] sm:$0xff]
      %v322 = vld [vmem:[%s3 + $0x88] sm:$0xff]
      %v323 = vld [vmem:[%s3 + $0x90] sm:$0xff]
      %v324 = vld [vmem:[%s3 + $0x98] sm:$0xff]
      %v325 = vld [vmem:[%s4] sm:$0xff]
      %v326 = vld [vmem:[%s4 + $0x8] sm:$0xff]
      %v327 = vld [vmem:[%s4 + $0x10] sm:$0xff]
      %v328 = vld [vmem:[%s4 + $0x18] sm:$0xff]
      %v329 = vld [vmem:[%s4 + $0x20] sm:$0xff]
      %v330 = vld [vmem:[%s4 + $0x28] sm:$0xff]
      %v331 = vld [vmem:[%s4 + $0x30] sm:$0xff]
      %v332 = vld [vmem:[%s4 + $0x38] sm:$0xff]
      %v333 = vld [vmem:[%s4 + $0x40] sm:$0xff]
      %v334 = vld [vmem:[%s4 + $0x48] sm:$0xff]
      %v335 = vld [vmem:[%s4 + $0x50] sm:$0xff]
      %v336 = vld [vmem:[%s4 + $0x58] sm:$0xff]
      %v337 = vld [vmem:[%s4 + $0x60] sm:$0xff]
      %v338 = vld [vmem:[%s4 + $0x68] sm:$0xff]
      %v339 = vld [vmem:[%s4 + $0x70] sm:$0xff]
      %v340 = vld [vmem:[%s4 + $0x78] sm:$0xff]
      %v341 = vld [vmem:[%s4 + $0x80] sm:$0xff]
      %v342 = vld [vmem:[%s4 + $0x88] sm:$0xff]
      %v343 = vld [vmem:[%s4 + $0x90] sm:$0xff]
      %v344 = vld [vmem:[%s4 + $0x98] sm:$0xff]
      %v345 = vld [vmem:[%s4 + $0xa0] sm:$0xff]
      %v346 = vld [vmem:[%s4 + $0xa8] sm:$0xff]
      %v347 = vld [vmem:[%s4 + $0xb0] sm:$0xff]
      %v348 = vld [vmem:[%s4 + $0xb8] sm:$0xff]
      %v349 = vld [vmem:[%s4 + $0xc0] sm:$0xff]
      %v350 = vld [vmem:[%s4 + $0xc8] sm:$0xff]
      %v351 = vld [vmem:[%s4 + $0xd0] sm:$0xff]
      %v352 = vld [vmem:[%s4 + $0xd8] sm:$0xff]
      %v353 = vld [vmem:[%s4 + $0xe0] sm:$0xff]
      %v354 = vld [vmem:[%s4 + $0xe8] sm:$0xff]
      %v355 = vld [vmem:[%s4 + $0xf0] sm:$0xff]
      %v356 = vld [vmem:[%s4 + $0xf8] sm:$0xff]
      %v357 = vld [vmem:[%s4 + $0x100] sm:$0xff]
      %v358 = vld [vmem:[%s4 + $0x108] sm:$0xff]
      %v359 = vld [vmem:[%s4 + $0x110] sm:$0xff]
      %v360 = vld [vmem:[%s4 + $0x118] sm:$0xff]
      %v361 = vld [vmem:[%s4 + $0x120] sm:$0xff]
      %v362 = vld [vmem:[%s4 + $0x128] sm:$0xff]
      %v363 = vld [vmem:[%s4 + $0x130] sm:$0xff]
      %v364 = vld [vmem:[%s4 + $0x138] sm:$0xff]
      %v365 = vld [vmem:[%s4 + $0x140] sm:$0xff]
      %v366 = vld [vmem:[%s4 + $0x148] sm:$0xff]
      %v367 = vld [vmem:[%s4 + $0x150] sm:$0xff]
      %v368 = vld [vmem:[%s4 + $0x158] sm:$0xff]
      %v369 = vld [vmem:[%s4 + $0x160] sm:$0xff]
      %v370 = vld [vmem:[%s4 + $0x168] sm:$0xff]
      %v371 = vld [vmem:[%s4 + $0x170] sm:$0xff]
      %v372 = vld [vmem:[%s4 + $0x178] sm:$0xff]
      %v373 = vld [vmem:[%s4 + $0x180] sm:$0xff]
      %v374 = vld [vmem:[%s4 + $0x188] sm:$0xff]
      %v375 = vld [vmem:[%s4 + $0x190] sm:$0xff]
      %v376 = vld [vmem:[%s4 + $0x198] sm:$0xff]
      %v377 = vld [vmem:[%s4 + $0x1a0] sm:$0xff]
      %v378 = vld [vmem:[%s4 + $0x1a8] sm:$0xff]
      %v379 = vld [vmem:[%s4 + $0x1b0] sm:$0xff]
      %v380 = vld [vmem:[%s4 + $0x1b8] sm:$0xff]
      %v381 = vld [vmem:[%s4 + $0x1c0] sm:$0xff]
      %v382 = vld [vmem:[%s4 + $0x1c8] sm:$0xff]
      %v383 = vld [vmem:[%s4 + $0x1d0] sm:$0xff]
      %v384 = vld [vmem:[%s4 + $0x1d8] sm:$0xff]
      %v385 = vld [vmem:[%s4 + $0x1e0] sm:$0xff]
      %v386 = vld [vmem:[%s4 + $0x1e8] sm:$0xff]
      %v387 = vld [vmem:[%s4 + $0x1f0] sm:$0xff]
      %v388 = vld [vmem:[%s4 + $0x1f8] sm:$0xff]
      %v389 = vld [vmem:[%s5] sm:$0x1]
      %vm390 = vcmask 261120
      %v392 = vsel %vm390, %v277, 0
      %v395 = vsel %vm390, %v278, 0
      %v398 = vsel %vm390, %v279, 0
      %v401 = vsel %vm390, %v280, 0
      %403 = vmatprep.subr.mxu0 %v286
      %404 = vmatpush1.msra.mxu0 %v285
      %405 = vmatprep.subr.mxu0 %v291
      %406 = vmatpush1.msra.mxu0 %v290
      %407 = vmatprep.subr.mxu0 %v296
      %408 = vmatpush1.msra.mxu0 %v295
      %409 = vmatprep.subr.mxu0 %v301
      %410 = vmatpush1.msra.mxu0 %v300
      %411 = vmatprep.subr.mxu0 0.0
      %412 = vmatpush1.msra.mxu0 0.0
      %413 = vmatprep.subr.mxu0 0.0
      %414 = vmatpush1.msra.mxu0 0.0
      %415 = vmatprep.subr.mxu0 0.0
      %416 = vmatpush1.msra.mxu0 0.0
      %417 = vmatprep.subr.mxu0 0.0
      %418 = vmatpush1.msra.mxu0 0.0
      %419 = vmatprep.subr.mxu0 0.0
      %420 = vmatpush1.msra.mxu0 0.0
      %421 = vmatprep.subr.mxu0 0.0
      %422 = vmatpush1.msra.mxu0 0.0
      %423 = vmatprep.subr.mxu0 0.0
      %424 = vmatpush1.msra.mxu0 0.0
      %425 = vmatprep.subr.mxu0 0.0
      %426 = vmatpush1.msra.mxu0 0.0
      %427 = vmatprep.subr.mxu0 0.0
      %428 = vmatpush1.msra.mxu0 0.0
      %429 = vmatprep.subr.mxu0 0.0
      %430 = vmatpush1.msra.mxu0 0.0
      %431 = vmatprep.subr.mxu0 0.0
      %432 = vmatpush1.msra.mxu0 0.0
      %433 = vmatprep.subr.mxu0 0.0
      %434 = vmatpush1.msra.mxu0 0.0
      %435 = vmatprep.subr.mxu0 0.0
      %436 = vmatpush1.msra.mxu0 0.0
      %437 = vmatprep.subr.mxu0 0.0
      %438 = vmatpush1.msra.mxu0 0.0
      %439 = vmatprep.subr.mxu0 0.0
      %440 = vmatpush1.msra.mxu0 0.0
      %441 = vmatprep.subr.mxu0 0.0
      %442 = vmatpush1.msra.mxu0 0.0
      %443 = vmatprep.subr.mxu0 0.0
      %444 = vmatpush1.msra.mxu0 0.0
      %445 = vmatprep.subr.mxu0 0.0
      %446 = vmatpush1.msra.mxu0 0.0
      %447 = vmatprep.subr.mxu0 0.0
      %448 = vmatpush1.msra.mxu0 0.0
      %449 = vmatprep.subr.mxu0 0.0
      %450 = vmatpush1.msra.mxu0 0.0
      %451 = vmatprep.subr.mxu0 0.0
      %452 = vmatpush1.msra.mxu0 0.0
      %453 = vmatprep.subr.mxu0 0.0
      %454 = vmatpush1.msra.mxu0 0.0
      %455 = vmatprep.subr.mxu0 0.0
      %456 = vmatpush1.msra.mxu0 0.0
      %457 = vmatprep.subr.mxu0 0.0
      %458 = vmatpush1.msra.mxu0 0.0
      %459 = vmatprep.subr.mxu0 0.0
      %460 = vmatpush1.msra.mxu0 0.0
      %461 = vmatprep.subr.mxu0 0.0
      %462 = vmatpush1.msra.mxu0 0.0
      %463 = vmatprep.subr.mxu0 0.0
      %464 = vmatpush1.msra.mxu0 0.0
      %465 = vmatprep.subr.mxu0 0.0
      %466 = vmatpush1.msra.mxu0 0.0
      %467 = vmatprep.mubr.f32.mxu0 0.0
      %468 = vmatmul.mubr.f32.gmra.mrb[0].mxu0 %v392
      %v469 = vpop.f32.mrb[0].mxu0
      %v470 = vadd.f32 0.0, %v469
      %v471 = vpop.f32.mrb[0].mxu0
      %v472 = vadd.f32 0.0, %v471
      %473 = vmatprep.mubr.f32.mxu0 0.0
      %474 = vmatmul.mubr.f32.gmra.mrb[0].mxu0 %v395
      %v475 = vpop.f32.mrb[0].mxu0
      %v476 = vadd.f32 0.0, %v475
      %v477 = vpop.f32.mrb[0].mxu0
      %v478 = vadd.f32 0.0, %v477
      %479 = vmatprep.mubr.f32.mxu0 0.0
      %480 = vmatmul.mubr.f32.gmra.mrb[0].mxu0 %v398
      %v481 = vpop.f32.mrb[0].mxu0
      %v482 = vadd.f32 0.0, %v481
      %v483 = vpop.f32.mrb[0].mxu0
      %v484 = vadd.f32 0.0, %v483
      %485 = vmatprep.mubr.f32.mxu0 0.0
      %486 = vmatmul.mubr.f32.gmra.mrb[0].mxu0 %v401
      %v487 = vpop.f32.mrb[0].mxu0
      %v488 = vadd.f32 0.0, %v487
      %v489 = vpop.f32.mrb[0].mxu0
      %v490 = vadd.f32 0.0, %v489
      %491 = vdwg.mxu0
      %492 = vmatprep.subr.mxu0 %v288
      %493 = vmatpush1.msra.mxu0 %v287
      %494 = vmatprep.subr.mxu0 %v293
      %495 = vmatpush1.msra.mxu0 %v292
      %496 = vmatprep.subr.mxu0 %v298
      %497 = vmatpush1.msra.mxu0 %v297
      %498 = vmatprep.subr.mxu0 %v303
      %499 = vmatpush1.msra.mxu0 %v302
      %500 = vmatprep.subr.mxu0 0.0
      %501 = vmatpush1.msra.mxu0 0.0
      %502 = vmatprep.subr.mxu0 0.0
      %503 = vmatpush1.msra.mxu0 0.0
      %504 = vmatprep.subr.mxu0 0.0
      %505 = vmatpush1.msra.mxu0 0.0
      %506 = vmatprep.subr.mxu0 0.0
      %507 = vmatpush1.msra.mxu0 0.0
      %508 = vmatprep.subr.mxu0 0.0
      %509 = vmatpush1.msra.mxu0 0.0
      %510 = vmatprep.subr.mxu0 0.0
      %511 = vmatpush1.msra.mxu0 0.0
      %512 = vmatprep.subr.mxu0 0.0
      %513 = vmatpush1.msra.mxu0 0.0
      %514 = vmatprep.subr.mxu0 0.0
      %515 = vmatpush1.msra.mxu0 0.0
      %516 = vmatprep.subr.mxu0 0.0
      %517 = vmatpush1.msra.mxu0 0.0
      %518 = vmatprep.subr.mxu0 0.0
      %519 = vmatpush1.msra.mxu0 0.0
      %520 = vmatprep.subr.mxu0 0.0
      %521 = vmatpush1.msra.mxu0 0.0
      %522 = vmatprep.subr.mxu0 0.0
      %523 = vmatpush1.msra.mxu0 0.0
      %524 = vmatprep.subr.mxu0 0.0
      %525 = vmatpush1.msra.mxu0 0.0
      %526 = vmatprep.subr.mxu0 0.0
      %527 = vmatpush1.msra.mxu0 0.0
      %528 = vmatprep.subr.mxu0 0.0
      %529 = vmatpush1.msra.mxu0 0.0
      %530 = vmatprep.subr.mxu0 0.0
      %531 = vmatpush1.msra.mxu0 0.0
      %532 = vmatprep.subr.mxu0 0.0
      %533 = vmatpush1.msra.mxu0 0.0
      %534 = vmatprep.subr.mxu0 0.0
      %535 = vmatpush1.msra.mxu0 0.0
      %536 = vmatprep.subr.mxu0 0.0
      %537 = vmatpush1.msra.mxu0 0.0
      %538 = vmatprep.subr.mxu0 0.0
      %539 = vmatpush1.msra.mxu0 0.0
      %540 = vmatprep.subr.mxu0 0.0
      %541 = vmatpush1.msra.mxu0 0.0
      %542 = vmatprep.subr.mxu0 0.0
      %543 = vmatpush1.msra.mxu0 0.0
      %544 = vmatprep.subr.mxu0 0.0
      %545 = vmatpush1.msra.mxu0 0.0
      %546 = vmatprep.subr.mxu0 0.0
      %547 = vmatpush1.msra.mxu0 0.0
      %548 = vmatprep.subr.mxu0 0.0
      %549 = vmatpush1.msra.mxu0 0.0
      %550 = vmatprep.subr.mxu0 0.0
      %551 = vmatpush1.msra.mxu0 0.0
      %552 = vmatprep.subr.mxu0 0.0
      %553 = vmatpush1.msra.mxu0 0.0
      %554 = vmatprep.subr.mxu0 0.0
      %555 = vmatpush1.msra.mxu0 0.0
      %556 = vmatprep.mubr.f32.mxu0 0.0
      %557 = vmatmul.mubr.f32.gmra.mrb[0].mxu0 %v392
      %v558 = vpop.f32.mrb[0].mxu0
      %v559 = vadd.f32 0.0, %v558
      %v560 = vpop.f32.mrb[0].mxu0
      %v561 = vadd.f32 0.0, %v560
      %562 = vmatprep.mubr.f32.mxu0 0.0
      %563 = vmatmul.mubr.f32.gmra.mrb[0].mxu0 %v395
      %v564 = vpop.f32.mrb[0].mxu0
      %v565 = vadd.f32 0.0, %v564
      %v566 = vpop.f32.mrb[0].mxu0
      %v567 = vadd.f32 0.0, %v566
      %568 = vmatprep.mubr.f32.mxu0 0.0
      %569 = vmatmul.mubr.f32.gmra.mrb[0].mxu0 %v398
      %v570 = vpop.f32.mrb[0].mxu0
      %v571 = vadd.f32 0.0, %v570
      %v572 = vpop.f32.mrb[0].mxu0
      %v573 = vadd.f32 0.0, %v572
      %574 = vmatprep.mubr.f32.mxu0 0.0
      %575 = vmatmul.mubr.f32.gmra.mrb[0].mxu0 %v401
      %v576 = vpop.f32.mrb[0].mxu0
      %v577 = vadd.f32 0.0, %v576
      %v578 = vpop.f32.mrb[0].mxu0
      %v579 = vadd.f32 0.0, %v578
      %580 = vdwg.mxu0
      %581 = vmatprep.subr.mxu0 0.0
      %582 = vmatpush1.msra.mxu0 %v289
      %583 = vmatprep.subr.mxu0 0.0
      %584 = vmatpush1.msra.mxu0 %v294
      %585 = vmatprep.subr.mxu0 0.0
      %586 = vmatpush1.msra.mxu0 %v299
      %587 = vmatprep.subr.mxu0 0.0
      %588 = vmatpush1.msra.mxu0 %v304
      %589 = vmatprep.subr.mxu0 0.0
      %590 = vmatpush1.msra.mxu0 0.0
      %591 = vmatprep.subr.mxu0 0.0
      %592 = vmatpush1.msra.mxu0 0.0
      %593 = vmatprep.subr.mxu0 0.0
      %594 = vmatpush1.msra.mxu0 0.0
      %595 = vmatprep.subr.mxu0 0.0
      %596 = vmatpush1.msra.mxu0 0.0
      %597 = vmatprep.subr.mxu0 0.0
      %598 = vmatpush1.msra.mxu0 0.0
      %599 = vmatprep.subr.mxu0 0.0
      %600 = vmatpush1.msra.mxu0 0.0
      %601 = vmatprep.subr.mxu0 0.0
      %602 = vmatpush1.msra.mxu0 0.0
      %603 = vmatprep.subr.mxu0 0.0
      %604 = vmatpush1.msra.mxu0 0.0
      %605 = vmatprep.subr.mxu0 0.0
      %606 = vmatpush1.msra.mxu0 0.0
      %607 = vmatprep.subr.mxu0 0.0
      %608 = vmatpush1.msra.mxu0 0.0
      %609 = vmatprep.subr.mxu0 0.0
      %610 = vmatpush1.msra.mxu0 0.0
      %611 = vmatprep.subr.mxu0 0.0
      %612 = vmatpush1.msra.mxu0 0.0
      %613 = vmatprep.subr.mxu0 0.0
      %614 = vmatpush1.msra.mxu0 0.0
      %615 = vmatprep.subr.mxu0 0.0
      %616 = vmatpush1.msra.mxu0 0.0
      %617 = vmatprep.subr.mxu0 0.0
      %618 = vmatpush1.msra.mxu0 0.0
      %619 = vmatprep.subr.mxu0 0.0
      %620 = vmatpush1.msra.mxu0 0.0
      %621 = vmatprep.subr.mxu0 0.0
      %622 = vmatpush1.msra.mxu0 0.0
      %623 = vmatprep.subr.mxu0 0.0
      %624 = vmatpush1.msra.mxu0 0.0
      %625 = vmatprep.subr.mxu0 0.0
      %626 = vmatpush1.msra.mxu0 0.0
      %627 = vmatprep.subr.mxu0 0.0
      %628 = vmatpush1.msra.mxu0 0.0
      %629 = vmatprep.subr.mxu0 0.0
      %630 = vmatpush1.msra.mxu0 0.0
      %631 = vmatprep.subr.mxu0 0.0
      %632 = vmatpush1.msra.mxu0 0.0
      %633 = vmatprep.subr.mxu0 0.0
      %634 = vmatpush1.msra.mxu0 0.0
      %635 = vmatprep.subr.mxu0 0.0
      %636 = vmatpush1.msra.mxu0 0.0
      %637 = vmatprep.subr.mxu0 0.0
      %638 = vmatpush1.msra.mxu0 0.0
      %639 = vmatprep.subr.mxu0 0.0
      %640 = vmatpush1.msra.mxu0 0.0
      %641 = vmatprep.subr.mxu0 0.0
      %642 = vmatpush1.msra.mxu0 0.0
      %643 = vmatprep.subr.mxu0 0.0
      %644 = vmatpush1.msra.mxu0 0.0
      %645 = vmatprep.mubr.f32.mxu0 0.0
      %646 = vmatmul.mubr.f32.gmra.mrb[0].mxu0 %v392
      %v647 = vpop.f32.mrb[0].mxu0
      %v648 = vadd.f32 0.0, %v647
      %v649 = vpop.f32.mrb[0].mxu0
      %650 = vmatprep.mubr.f32.mxu0 0.0
      %651 = vmatmul.mubr.f32.gmra.mrb[0].mxu0 %v395
      %v652 = vpop.f32.mrb[0].mxu0
      %v653 = vadd.f32 0.0, %v652
      %v654 = vpop.f32.mrb[0].mxu0
      %655 = vmatprep.mubr.f32.mxu0 0.0
      %656 = vmatmul.mubr.f32.gmra.mrb[0].mxu0 %v398
      %v657 = vpop.f32.mrb[0].mxu0
      %v658 = vadd.f32 0.0, %v657
      %v659 = vpop.f32.mrb[0].mxu0
      %660 = vmatprep.mubr.f32.mxu0 0.0
      %661 = vmatmul.mubr.f32.gmra.mrb[0].mxu0 %v401
      %v662 = vpop.f32.mrb[0].mxu0
      %v663 = vadd.f32 0.0, %v662
      %v664 = vpop.f32.mrb[0].mxu0
      %665 = vdwg.mxu0
      %v667 = vsel %vm390, %v281, 0
      %v670 = vsel %vm390, %v282, 0
      %v673 = vsel %vm390, %v283, 0
      %v676 = vsel %vm390, %v284, 0
      %678 = vmatprep.subr.mxu0 %v306
      %679 = vmatpush1.msra.mxu0 %v305
      %680 = vmatprep.subr.mxu0 %v311
      %681 = vmatpush1.msra.mxu0 %v310
      %682 = vmatprep.subr.mxu0 %v316
      %683 = vmatpush1.msra.mxu0 %v315
      %684 = vmatprep.subr.mxu0 %v321
      %685 = vmatpush1.msra.mxu0 %v320
      %686 = vmatprep.subr.mxu0 0.0
      %687 = vmatpush1.msra.mxu0 0.0
      %688 = vmatprep.subr.mxu0 0.0
      %689 = vmatpush1.msra.mxu0 0.0
      %690 = vmatprep.subr.mxu0 0.0
      %691 = vmatpush1.msra.mxu0 0.0
      %692 = vmatprep.subr.mxu0 0.0
      %693 = vmatpush1.msra.mxu0 0.0
      %694 = vmatprep.subr.mxu0 0.0
      %695 = vmatpush1.msra.mxu0 0.0
      %696 = vmatprep.subr.mxu0 0.0
      %697 = vmatpush1.msra.mxu0 0.0
      %698 = vmatprep.subr.mxu0 0.0
      %699 = vmatpush1.msra.mxu0 0.0
      %700 = vmatprep.subr.mxu0 0.0
      %701 = vmatpush1.msra.mxu0 0.0
      %702 = vmatprep.subr.mxu0 0.0
      %703 = vmatpush1.msra.mxu0 0.0
      %704 = vmatprep.subr.mxu0 0.0
      %705 = vmatpush1.msra.mxu0 0.0
      %706 = vmatprep.subr.mxu0 0.0
      %707 = vmatpush1.msra.mxu0 0.0
      %708 = vmatprep.subr.mxu0 0.0
      %709 = vmatpush1.msra.mxu0 0.0
      %710 = vmatprep.subr.mxu0 0.0
      %711 = vmatpush1.msra.mxu0 0.0
      %712 = vmatprep.subr.mxu0 0.0
      %713 = vmatpush1.msra.mxu0 0.0
      %714 = vmatprep.subr.mxu0 0.0
      %715 = vmatpush1.msra.mxu0 0.0
      %716 = vmatprep.subr.mxu0 0.0
      %717 = vmatpush1.msra.mxu0 0.0
      %718 = vmatprep.subr.mxu0 0.0
      %719 = vmatpush1.msra.mxu0 0.0
      %720 = vmatprep.subr.mxu0 0.0
      %721 = vmatpush1.msra.mxu0 0.0
      %722 = vmatprep.subr.mxu0 0.0
      %723 = vmatpush1.msra.mxu0 0.0
      %724 = vmatprep.subr.mxu0 0.0
      %725 = vmatpush1.msra.mxu0 0.0
      %726 = vmatprep.subr.mxu0 0.0
      %727 = vmatpush1.msra.mxu0 0.0
      %728 = vmatprep.subr.mxu0 0.0
      %729 = vmatpush1.msra.mxu0 0.0
      %730 = vmatprep.subr.mxu0 0.0
      %731 = vmatpush1.msra.mxu0 0.0
      %732 = vmatprep.subr.mxu0 0.0
      %733 = vmatpush1.msra.mxu0 0.0
      %734 = vmatprep.subr.mxu0 0.0
      %735 = vmatpush1.msra.mxu0 0.0
      %736 = vmatprep.subr.mxu0 0.0
      %737 = vmatpush1.msra.mxu0 0.0
      %738 = vmatprep.subr.mxu0 0.0
      %739 = vmatpush1.msra.mxu0 0.0
      %740 = vmatprep.subr.mxu0 0.0
      %741 = vmatpush1.msra.mxu0 0.0
      %742 = vmatprep.mubr.f32.mxu0 0.0
      %743 = vmatmul.mubr.f32.gmra.mrb[0].mxu0 %v667
      %v744 = vpop.f32.mrb[0].mxu0
      %v745 = vadd.f32 0.0, %v744
      %v746 = vpop.f32.mrb[0].mxu0
      %v747 = vadd.f32 0.0, %v746
      %748 = vmatprep.mubr.f32.mxu0 0.0
      %749 = vmatmul.mubr.f32.gmra.mrb[0].mxu0 %v670
      %v750 = vpop.f32.mrb[0].mxu0
      %v751 = vadd.f32 0.0, %v750
      %v752 = vpop.f32.mrb[0].mxu0
      %v753 = vadd.f32 0.0, %v752
      %754 = vmatprep.mubr.f32.mxu0 0.0
      %755 = vmatmul.mubr.f32.gmra.mrb[0].mxu0 %v673
      %v756 = vpop.f32.mrb[0].mxu0
      %v757 = vadd.f32 0.0, %v756
      %v758 = vpop.f32.mrb[0].mxu0
      %v759 = vadd.f32 0.0, %v758
      %760 = vmatprep.mubr.f32.mxu0 0.0
      %761 = vmatmul.mubr.f32.gmra.mrb[0].mxu0 %v676
      %v762 = vpop.f32.mrb[0].mxu0
      %v763 = vadd.f32 0.0, %v762
      %v764 = vpop.f32.mrb[0].mxu0
      %v765 = vadd.f32 0.0, %v764
      %766 = vdwg.mxu0
      %767 = vmatprep.subr.mxu0 %v308
      %768 = vmatpush1.msra.mxu0 %v307
      %769 = vmatprep.subr.mxu0 %v313
      %770 = vmatpush1.msra.mxu0 %v312
      %771 = vmatprep.subr.mxu0 %v318
      %772 = vmatpush1.msra.mxu0 %v317
      %773 = vmatprep.subr.mxu0 %v323
      %774 = vmatpush1.msra.mxu0 %v322
      %775 = vmatprep.subr.mxu0 0.0
      %776 = vmatpush1.msra.mxu0 0.0
      %777 = vmatprep.subr.mxu0 0.0
      %778 = vmatpush1.msra.mxu0 0.0
      %779 = vmatprep.subr.mxu0 0.0
      %780 = vmatpush1.msra.mxu0 0.0
      %781 = vmatprep.subr.mxu0 0.0
      %782 = vmatpush1.msra.mxu0 0.0
      %783 = vmatprep.subr.mxu0 0.0
      %784 = vmatpush1.msra.mxu0 0.0
      %785 = vmatprep.subr.mxu0 0.0
      %786 = vmatpush1.msra.mxu0 0.0
      %787 = vmatprep.subr.mxu0 0.0
      %788 = vmatpush1.msra.mxu0 0.0
      %789 = vmatprep.subr.mxu0 0.0
      %790 = vmatpush1.msra.mxu0 0.0
      %791 = vmatprep.subr.mxu0 0.0
      %792 = vmatpush1.msra.mxu0 0.0
      %793 = vmatprep.subr.mxu0 0.0
      %794 = vmatpush1.msra.mxu0 0.0
      %795 = vmatprep.subr.mxu0 0.0
      %796 = vmatpush1.msra.mxu0 0.0
      %797 = vmatprep.subr.mxu0 0.0
      %798 = vmatpush1.msra.mxu0 0.0
      %799 = vmatprep.subr.mxu0 0.0
      %800 = vmatpush1.msra.mxu0 0.0
      %801 = vmatprep.subr.mxu0 0.0
      %802 = vmatpush1.msra.mxu0 0.0
      %803 = vmatprep.subr.mxu0 0.0
      %804 = vmatpush1.msra.mxu0 0.0
      %805 = vmatprep.subr.mxu0 0.0
      %806 = vmatpush1.msra.mxu0 0.0
      %807 = vmatprep.subr.mxu0 0.0
      %808 = vmatpush1.msra.mxu0 0.0
      %809 = vmatprep.subr.mxu0 0.0
      %810 = vmatpush1.msra.mxu0 0.0
      %811 = vmatprep.subr.mxu0 0.0
      %812 = vmatpush1.msra.mxu0 0.0
      %813 = vmatprep.subr.mxu0 0.0
      %814 = vmatpush1.msra.mxu0 0.0
      %815 = vmatprep.subr.mxu0 0.0
      %816 = vmatpush1.msra.mxu0 0.0
      %817 = vmatprep.subr.mxu0 0.0
      %818 = vmatpush1.msra.mxu0 0.0
      %819 = vmatprep.subr.mxu0 0.0
      %820 = vmatpush1.msra.mxu0 0.0
      %821 = vmatprep.subr.mxu0 0.0
      %822 = vmatpush1.msra.mxu0 0.0
      %823 = vmatprep.subr.mxu0 0.0
      %824 = vmatpush1.msra.mxu0 0.0
      %825 = vmatprep.subr.mxu0 0.0
      %826 = vmatpush1.msra.mxu0 0.0
      %827 = vmatprep.subr.mxu0 0.0
      %828 = vmatpush1.msra.mxu0 0.0
      %829 = vmatprep.subr.mxu0 0.0
      %830 = vmatpush1.msra.mxu0 0.0
      %831 = vmatprep.mubr.f32.mxu0 0.0
      %832 = vmatmul.mubr.f32.gmra.mrb[0].mxu0 %v667
      %v833 = vpop.f32.mrb[0].mxu0
      %v834 = vadd.f32 0.0, %v833
      %v835 = vpop.f32.mrb[0].mxu0
      %v836 = vadd.f32 0.0, %v835
      %837 = vmatprep.mubr.f32.mxu0 0.0
      %838 = vmatmul.mubr.f32.gmra.mrb[0].mxu0 %v670
      %v839 = vpop.f32.mrb[0].mxu0
      %v840 = vadd.f32 0.0, %v839
      %v841 = vpop.f32.mrb[0].mxu0
      %v842 = vadd.f32 0.0, %v841
      %843 = vmatprep.mubr.f32.mxu0 0.0
      %844 = vmatmul.mubr.f32.gmra.mrb[0].mxu0 %v673
      %v845 = vpop.f32.mrb[0].mxu0
      %v846 = vadd.f32 0.0, %v845
      %v847 = vpop.f32.mrb[0].mxu0
      %v848 = vadd.f32 0.0, %v847
      %849 = vmatprep.mubr.f32.mxu0 0.0
      %850 = vmatmul.mubr.f32.gmra.mrb[0].mxu0 %v676
      %v851 = vpop.f32.mrb[0].mxu0
      %v852 = vadd.f32 0.0, %v851
      %v853 = vpop.f32.mrb[0].mxu0
      %v854 = vadd.f32 0.0, %v853
      %855 = vdwg.mxu0
      %856 = vmatprep.subr.mxu0 0.0
      %857 = vmatpush1.msra.mxu0 %v309
      %858 = vmatprep.subr.mxu0 0.0
      %859 = vmatpush1.msra.mxu0 %v314
      %860 = vmatprep.subr.mxu0 0.0
      %861 = vmatpush1.msra.mxu0 %v319
      %862 = vmatprep.subr.mxu0 0.0
      %863 = vmatpush1.msra.mxu0 %v324
      %864 = vmatprep.subr.mxu0 0.0
      %865 = vmatpush1.msra.mxu0 0.0
      %866 = vmatprep.subr.mxu0 0.0
      %867 = vmatpush1.msra.mxu0 0.0
      %868 = vmatprep.subr.mxu0 0.0
      %869 = vmatpush1.msra.mxu0 0.0
      %870 = vmatprep.subr.mxu0 0.0
      %871 = vmatpush1.msra.mxu0 0.0
      %872 = vmatprep.subr.mxu0 0.0
      %873 = vmatpush1.msra.mxu0 0.0
      %874 = vmatprep.subr.mxu0 0.0
      %875 = vmatpush1.msra.mxu0 0.0
      %876 = vmatprep.subr.mxu0 0.0
      %877 = vmatpush1.msra.mxu0 0.0
      %878 = vmatprep.subr.mxu0 0.0
      %879 = vmatpush1.msra.mxu0 0.0
      %880 = vmatprep.subr.mxu0 0.0
      %881 = vmatpush1.msra.mxu0 0.0
      %882 = vmatprep.subr.mxu0 0.0
      %883 = vmatpush1.msra.mxu0 0.0
      %884 = vmatprep.subr.mxu0 0.0
      %885 = vmatpush1.msra.mxu0 0.0
      %886 = vmatprep.subr.mxu0 0.0
      %887 = vmatpush1.msra.mxu0 0.0
      %888 = vmatprep.subr.mxu0 0.0
      %889 = vmatpush1.msra.mxu0 0.0
      %890 = vmatprep.subr.mxu0 0.0
      %891 = vmatpush1.msra.mxu0 0.0
      %892 = vmatprep.subr.mxu0 0.0
      %893 = vmatpush1.msra.mxu0 0.0
      %894 = vmatprep.subr.mxu0 0.0
      %895 = vmatpush1.msra.mxu0 0.0
      %896 = vmatprep.subr.mxu0 0.0
      %897 = vmatpush1.msra.mxu0 0.0
      %898 = vmatprep.subr.mxu0 0.0
      %899 = vmatpush1.msra.mxu0 0.0
      %900 = vmatprep.subr.mxu0 0.0
      %901 = vmatpush1.msra.mxu0 0.0
      %902 = vmatprep.subr.mxu0 0.0
      %903 = vmatpush1.msra.mxu0 0.0
      %904 = vmatprep.subr.mxu0 0.0
      %905 = vmatpush1.msra.mxu0 0.0
      %906 = vmatprep.subr.mxu0 0.0
      %907 = vmatpush1.msra.mxu0 0.0
      %908 = vmatprep.subr.mxu0 0.0
      %909 = vmatpush1.msra.mxu0 0.0
      %910 = vmatprep.subr.mxu0 0.0
      %911 = vmatpush1.msra.mxu0 0.0
      %912 = vmatprep.subr.mxu0 0.0
      %913 = vmatpush1.msra.mxu0 0.0
      %914 = vmatprep.subr.mxu0 0.0
      %915 = vmatpush1.msra.mxu0 0.0
      %916 = vmatprep.subr.mxu0 0.0
      %917 = vmatpush1.msra.mxu0 0.0
      %918 = vmatprep.subr.mxu0 0.0
      %919 = vmatpush1.msra.mxu0 0.0
      %920 = vmatprep.mubr.f32.mxu0 0.0
      %921 = vmatmul.mubr.f32.gmra.mrb[0].mxu0 %v667
      %v922 = vpop.f32.mrb[0].mxu0
      %v923 = vadd.f32 0.0, %v922
      %v924 = vpop.f32.mrb[0].mxu0
      %925 = vmatprep.mubr.f32.mxu0 0.0
      %926 = vmatmul.mubr.f32.gmra.mrb[0].mxu0 %v670
      %v927 = vpop.f32.mrb[0].mxu0
      %v928 = vadd.f32 0.0, %v927
      %v929 = vpop.f32.mrb[0].mxu0
      %930 = vmatprep.mubr.f32.mxu0 0.0
      %931 = vmatmul.mubr.f32.gmra.mrb[0].mxu0 %v673
      %v932 = vpop.f32.mrb[0].mxu0
      %v933 = vadd.f32 0.0, %v932
      %v934 = vpop.f32.mrb[0].mxu0
      %935 = vmatprep.mubr.f32.mxu0 0.0
      %936 = vmatmul.mubr.f32.gmra.mrb[0].mxu0 %v676
      %v937 = vpop.f32.mrb[0].mxu0
      %v938 = vadd.f32 0.0, %v937
      %v939 = vpop.f32.mrb[0].mxu0
      %940 = vdwg.mxu0
      %v941 = vadd.f32 %v648, %v923
      %v942 = vadd.f32 %v653, %v928
      %v943 = vadd.f32 %v658, %v933
      %v944 = vadd.f32 %v663, %v938
      %v945 = vmul.f32 %v470, %v745
      %v946 = vmul.f32 %v472, %v747
      %v947 = vmul.f32 %v559, %v834
      %v948 = vmul.f32 %v561, %v836
      %v949 = vmul.f32 %v476, %v751
      %v950 = vmul.f32 %v478, %v753
      %v951 = vmul.f32 %v565, %v840
      %v952 = vmul.f32 %v567, %v842
      %v953 = vmul.f32 %v482, %v757
      %v954 = vmul.f32 %v484, %v759
      %v955 = vmul.f32 %v571, %v846
      %v956 = vmul.f32 %v573, %v848
      %v957 = vmul.f32 %v488, %v763
      %v958 = vmul.f32 %v490, %v765
      %v959 = vmul.f32 %v577, %v852
      %v960 = vmul.f32 %v579, %v854
      %v961 = vmul.f32 %v470, %v470
      %v962 = vmul.f32 %v472, %v472
      %v963 = vmul.f32 %v559, %v559
      %v964 = vmul.f32 %v561, %v561
      %v965 = vmul.f32 %v476, %v476
      %v966 = vmul.f32 %v478, %v478
      %v967 = vmul.f32 %v565, %v565
      %v968 = vmul.f32 %v567, %v567
      %v969 = vmul.f32 %v482, %v482
      %v970 = vmul.f32 %v484, %v484
      %v971 = vmul.f32 %v571, %v571
      %v972 = vmul.f32 %v573, %v573
      %v973 = vmul.f32 %v488, %v488
      %v974 = vmul.f32 %v490, %v490
      %v975 = vmul.f32 %v577, %v577
      %v976 = vmul.f32 %v579, %v579
      %v977 = vmul.f32 %v745, %v745
      %v978 = vmul.f32 %v747, %v747
      %v979 = vmul.f32 %v834, %v834
      %v980 = vmul.f32 %v836, %v836
      %v981 = vmul.f32 %v751, %v751
      %v982 = vmul.f32 %v753, %v753
      %v983 = vmul.f32 %v840, %v840
      %v984 = vmul.f32 %v842, %v842
      %v985 = vmul.f32 %v757, %v757
      %v986 = vmul.f32 %v759, %v759
      %v987 = vmul.f32 %v846, %v846
      %v988 = vmul.f32 %v848, %v848
      %v989 = vmul.f32 %v763, %v763
      %v990 = vmul.f32 %v765, %v765
      %v991 = vmul.f32 %v852, %v852
      %v992 = vmul.f32 %v854, %v854
      %993 = vmatprep.subr.mxu0 0.0
      %994 = vmatpush1.msra.mxu0 %v325
      %995 = vmatprep.subr.mxu0 0.0
      %996 = vmatpush1.msra.mxu0 %v326
      %997 = vmatprep.subr.mxu0 0.0
      %998 = vmatpush1.msra.mxu0 %v327
      %999 = vmatprep.subr.mxu0 0.0
      %1000 = vmatpush1.msra.mxu0 %v328
      %1001 = vmatprep.subr.mxu0 0.0
      %1002 = vmatpush1.msra.mxu0 %v329
      %1003 = vmatprep.subr.mxu0 0.0
      %1004 = vmatpush1.msra.mxu0 %v330
      %1005 = vmatprep.subr.mxu0 0.0
      %1006 = vmatpush1.msra.mxu0 %v331
      %1007 = vmatprep.subr.mxu0 0.0
      %1008 = vmatpush1.msra.mxu0 %v332
      %1009 = vmatprep.subr.mxu0 0.0
      %1010 = vmatpush1.msra.mxu0 %v333
      %1011 = vmatprep.subr.mxu0 0.0
      %1012 = vmatpush1.msra.mxu0 %v334
      %1013 = vmatprep.subr.mxu0 0.0
      %1014 = vmatpush1.msra.mxu0 %v335
      %1015 = vmatprep.subr.mxu0 0.0
      %1016 = vmatpush1.msra.mxu0 %v336
      %1017 = vmatprep.subr.mxu0 0.0
      %1018 = vmatpush1.msra.mxu0 %v337
      %1019 = vmatprep.subr.mxu0 0.0
      %1020 = vmatpush1.msra.mxu0 %v338
      %1021 = vmatprep.subr.mxu0 0.0
      %1022 = vmatpush1.msra.mxu0 %v339
      %1023 = vmatprep.subr.mxu0 0.0
      %1024 = vmatpush1.msra.mxu0 %v340
      %1025 = vmatprep.subr.mxu0 0.0
      %1026 = vmatpush1.msra.mxu0 %v341
      %1027 = vmatprep.subr.mxu0 0.0
      %1028 = vmatpush1.msra.mxu0 %v342
      %1029 = vmatprep.subr.mxu0 0.0
      %1030 = vmatpush1.msra.mxu0 %v343
      %1031 = vmatprep.subr.mxu0 0.0
      %1032 = vmatpush1.msra.mxu0 %v344
      %1033 = vmatprep.subr.mxu0 0.0
      %1034 = vmatpush1.msra.mxu0 %v345
      %1035 = vmatprep.subr.mxu0 0.0
      %1036 = vmatpush1.msra.mxu0 %v346
      %1037 = vmatprep.subr.mxu0 0.0
      %1038 = vmatpush1.msra.mxu0 %v347
      %1039 = vmatprep.subr.mxu0 0.0
      %1040 = vmatpush1.msra.mxu0 %v348
      %1041 = vmatprep.subr.mxu0 0.0
      %1042 = vmatpush1.msra.mxu0 %v349
      %1043 = vmatprep.subr.mxu0 0.0
      %1044 = vmatpush1.msra.mxu0 %v350
      %1045 = vmatprep.subr.mxu0 0.0
      %1046 = vmatpush1.msra.mxu0 %v351
      %1047 = vmatprep.subr.mxu0 0.0
      %1048 = vmatpush1.msra.mxu0 %v352
      %1049 = vmatprep.subr.mxu0 0.0
      %1050 = vmatpush1.msra.mxu0 %v353
      %1051 = vmatprep.subr.mxu0 0.0
      %1052 = vmatpush1.msra.mxu0 %v354
      %1053 = vmatprep.subr.mxu0 0.0
      %1054 = vmatpush1.msra.mxu0 %v355
      %1055 = vmatprep.subr.mxu0 0.0
      %1056 = vmatpush1.msra.mxu0 %v356
      %1057 = vmatprep.mubr.f32.mxu0 %v946
      %1058 = vmatmul.mubr.f32.gmra.mrb[0].mxu0 %v945
      %v1059 = vpop.f32.mrb[0].mxu0
      %v1060 = vadd.f32 0.0, %v1059
      %v1061 = vpop.f32.mrb[0].mxu0
      %1062 = vmatprep.mubr.f32.mxu0 %v950
      %1063 = vmatmul.mubr.f32.gmra.mrb[0].mxu0 %v949
      %v1064 = vpop.f32.mrb[0].mxu0
      %v1065 = vadd.f32 0.0, %v1064
      %v1066 = vpop.f32.mrb[0].mxu0
      %1067 = vmatprep.mubr.f32.mxu0 %v954
      %1068 = vmatmul.mubr.f32.gmra.mrb[0].mxu0 %v953
      %v1069 = vpop.f32.mrb[0].mxu0
      %v1070 = vadd.f32 0.0, %v1069
      %v1071 = vpop.f32.mrb[0].mxu0
      %1072 = vmatprep.mubr.f32.mxu0 %v958
      %1073 = vmatmul.mubr.f32.gmra.mrb[0].mxu0 %v957
      %v1074 = vpop.f32.mrb[0].mxu0
      %v1075 = vadd.f32 0.0, %v1074
      %v1076 = vpop.f32.mrb[0].mxu0
      %1077 = vmatprep.mubr.f32.mxu0 %v962
      %1078 = vmatmul.mubr.f32.gmra.mrb[0].mxu0 %v961
      %v1079 = vpop.f32.mrb[0].mxu0
      %v1080 = vadd.f32 0.0, %v1079
      %v1081 = vpop.f32.mrb[0].mxu0
      %1082 = vmatprep.mubr.f32.mxu0 %v966
      %1083 = vmatmul.mubr.f32.gmra.mrb[0].mxu0 %v965
      %v1084 = vpop.f32.mrb[0].mxu0
      %v1085 = vadd.f32 0.0, %v1084
      %v1086 = vpop.f32.mrb[0].mxu0
      %1087 = vmatprep.mubr.f32.mxu0 %v970
      %1088 = vmatmul.mubr.f32.gmra.mrb[0].mxu0 %v969
      %v1089 = vpop.f32.mrb[0].mxu0
      %v1090 = vadd.f32 0.0, %v1089
      %v1091 = vpop.f32.mrb[0].mxu0
      %1092 = vmatprep.mubr.f32.mxu0 %v974
      %1093 = vmatmul.mubr.f32.gmra.mrb[0].mxu0 %v973
      %v1094 = vpop.f32.mrb[0].mxu0
      %v1095 = vadd.f32 0.0, %v1094
      %v1096 = vpop.f32.mrb[0].mxu0
      %1097 = vmatprep.mubr.f32.mxu0 %v978
      %1098 = vmatmul.mubr.f32.gmra.mrb[0].mxu0 %v977
      %v1099 = vpop.f32.mrb[0].mxu0
      %v1100 = vadd.f32 0.0, %v1099
      %v1101 = vpop.f32.mrb[0].mxu0
      %1102 = vmatprep.mubr.f32.mxu0 %v982
      %1103 = vmatmul.mubr.f32.gmra.mrb[0].mxu0 %v981
      %v1104 = vpop.f32.mrb[0].mxu0
      %v1105 = vadd.f32 0.0, %v1104
      %v1106 = vpop.f32.mrb[0].mxu0
      %1107 = vmatprep.mubr.f32.mxu0 %v986
      %1108 = vmatmul.mubr.f32.gmra.mrb[0].mxu0 %v985
      %v1109 = vpop.f32.mrb[0].mxu0
      %v1110 = vadd.f32 0.0, %v1109
      %v1111 = vpop.f32.mrb[0].mxu0
      %1112 = vmatprep.mubr.f32.mxu0 %v990
      %1113 = vmatmul.mubr.f32.gmra.mrb[0].mxu0 %v989
      %v1114 = vpop.f32.mrb[0].mxu0
      %v1115 = vadd.f32 0.0, %v1114
      %v1116 = vpop.f32.mrb[0].mxu0
      %1117 = vdwg.mxu0
      %1118 = vmatprep.subr.mxu0 0.0
      %1119 = vmatpush1.msra.mxu0 %v357
      %1120 = vmatprep.subr.mxu0 0.0
      %1121 = vmatpush1.msra.mxu0 %v358
      %1122 = vmatprep.subr.mxu0 0.0
      %1123 = vmatpush1.msra.mxu0 %v359
      %1124 = vmatprep.subr.mxu0 0.0
      %1125 = vmatpush1.msra.mxu0 %v360
      %1126 = vmatprep.subr.mxu0 0.0
      %1127 = vmatpush1.msra.mxu0 %v361
      %1128 = vmatprep.subr.mxu0 0.0
      %1129 = vmatpush1.msra.mxu0 %v362
      %1130 = vmatprep.subr.mxu0 0.0
      %1131 = vmatpush1.msra.mxu0 %v363
      %1132 = vmatprep.subr.mxu0 0.0
      %1133 = vmatpush1.msra.mxu0 %v364
      %1134 = vmatprep.subr.mxu0 0.0
      %1135 = vmatpush1.msra.mxu0 %v365
      %1136 = vmatprep.subr.mxu0 0.0
      %1137 = vmatpush1.msra.mxu0 %v366
      %1138 = vmatprep.subr.mxu0 0.0
      %1139 = vmatpush1.msra.mxu0 %v367
      %1140 = vmatprep.subr.mxu0 0.0
      %1141 = vmatpush1.msra.mxu0 %v368
      %1142 = vmatprep.subr.mxu0 0.0
      %1143 = vmatpush1.msra.mxu0 %v369
      %1144 = vmatprep.subr.mxu0 0.0
      %1145 = vmatpush1.msra.mxu0 %v370
      %1146 = vmatprep.subr.mxu0 0.0
      %1147 = vmatpush1.msra.mxu0 %v371
      %1148 = vmatprep.subr.mxu0 0.0
      %1149 = vmatpush1.msra.mxu0 %v372
      %1150 = vmatprep.subr.mxu0 0.0
      %1151 = vmatpush1.msra.mxu0 %v373
      %1152 = vmatprep.subr.mxu0 0.0
      %1153 = vmatpush1.msra.mxu0 %v374
      %1154 = vmatprep.subr.mxu0 0.0
      %1155 = vmatpush1.msra.mxu0 %v375
      %1156 = vmatprep.subr.mxu0 0.0
      %1157 = vmatpush1.msra.mxu0 %v376
      %1158 = vmatprep.subr.mxu0 0.0
      %1159 = vmatpush1.msra.mxu0 %v377
      %1160 = vmatprep.subr.mxu0 0.0
      %1161 = vmatpush1.msra.mxu0 %v378
      %1162 = vmatprep.subr.mxu0 0.0
      %1163 = vmatpush1.msra.mxu0 %v379
      %1164 = vmatprep.subr.mxu0 0.0
      %1165 = vmatpush1.msra.mxu0 %v380
      %1166 = vmatprep.subr.mxu0 0.0
      %1167 = vmatpush1.msra.mxu0 %v381
      %1168 = vmatprep.subr.mxu0 0.0
      %1169 = vmatpush1.msra.mxu0 %v382
      %1170 = vmatprep.subr.mxu0 0.0
      %1171 = vmatpush1.msra.mxu0 %v383
      %1172 = vmatprep.subr.mxu0 0.0
      %1173 = vmatpush1.msra.mxu0 %v384
      %1174 = vmatprep.subr.mxu0 0.0
      %1175 = vmatpush1.msra.mxu0 %v385
      %1176 = vmatprep.subr.mxu0 0.0
      %1177 = vmatpush1.msra.mxu0 %v386
      %1178 = vmatprep.subr.mxu0 0.0
      %1179 = vmatpush1.msra.mxu0 %v387
      %1180 = vmatprep.subr.mxu0 0.0
      %1181 = vmatpush1.msra.mxu0 %v388
      %1182 = vmatprep.mubr.f32.mxu0 %v948
      %1183 = vmatmul.mubr.f32.gmra.mrb[0].mxu0 %v947
      %v1184 = vpop.f32.mrb[0].mxu0
      %v1185 = vadd.f32 %v1060, %v1184
      %v1186 = vpop.f32.mrb[0].mxu0
      %1187 = vmatprep.mubr.f32.mxu0 %v952
      %1188 = vmatmul.mubr.f32.gmra.mrb[0].mxu0 %v951
      %v1189 = vpop.f32.mrb[0].mxu0
      %v1190 = vadd.f32 %v1065, %v1189
      %v1191 = vpop.f32.mrb[0].mxu0
      %1192 = vmatprep.mubr.f32.mxu0 %v956
      %1193 = vmatmul.mubr.f32.gmra.mrb[0].mxu0 %v955
      %v1194 = vpop.f32.mrb[0].mxu0
      %v1195 = vadd.f32 %v1070, %v1194
      %v1196 = vpop.f32.mrb[0].mxu0
      %1197 = vmatprep.mubr.f32.mxu0 %v960
      %1198 = vmatmul.mubr.f32.gmra.mrb[0].mxu0 %v959
      %v1199 = vpop.f32.mrb[0].mxu0
      %v1200 = vadd.f32 %v1075, %v1199
      %v1201 = vpop.f32.mrb[0].mxu0
      %1202 = vmatprep.mubr.f32.mxu0 %v964
      %1203 = vmatmul.mubr.f32.gmra.mrb[0].mxu0 %v963
      %v1204 = vpop.f32.mrb[0].mxu0
      %v1205 = vadd.f32 %v1080, %v1204
      %v1206 = vpop.f32.mrb[0].mxu0
      %1207 = vmatprep.mubr.f32.mxu0 %v968
      %1208 = vmatmul.mubr.f32.gmra.mrb[0].mxu0 %v967
      %v1209 = vpop.f32.mrb[0].mxu0
      %v1210 = vadd.f32 %v1085, %v1209
      %v1211 = vpop.f32.mrb[0].mxu0
      %1212 = vmatprep.mubr.f32.mxu0 %v972
      %1213 = vmatmul.mubr.f32.gmra.mrb[0].mxu0 %v971
      %v1214 = vpop.f32.mrb[0].mxu0
      %v1215 = vadd.f32 %v1090, %v1214
      %v1216 = vpop.f32.mrb[0].mxu0
      %1217 = vmatprep.mubr.f32.mxu0 %v976
      %1218 = vmatmul.mubr.f32.gmra.mrb[0].mxu0 %v975
      %v1219 = vpop.f32.mrb[0].mxu0
      %v1220 = vadd.f32 %v1095, %v1219
      %v1221 = vpop.f32.mrb[0].mxu0
      %1222 = vmatprep.mubr.f32.mxu0 %v980
      %1223 = vmatmul.mubr.f32.gmra.mrb[0].mxu0 %v979
      %v1224 = vpop.f32.mrb[0].mxu0
      %v1225 = vadd.f32 %v1100, %v1224
      %v1226 = vpop.f32.mrb[0].mxu0
      %1227 = vmatprep.mubr.f32.mxu0 %v984
      %1228 = vmatmul.mubr.f32.gmra.mrb[0].mxu0 %v983
      %v1229 = vpop.f32.mrb[0].mxu0
      %v1230 = vadd.f32 %v1105, %v1229
      %v1231 = vpop.f32.mrb[0].mxu0
      %1232 = vmatprep.mubr.f32.mxu0 %v988
      %1233 = vmatmul.mubr.f32.gmra.mrb[0].mxu0 %v987
      %v1234 = vpop.f32.mrb[0].mxu0
      %v1235 = vadd.f32 %v1110, %v1234
      %v1236 = vpop.f32.mrb[0].mxu0
      %1237 = vmatprep.mubr.f32.mxu0 %v992
      %1238 = vmatmul.mubr.f32.gmra.mrb[0].mxu0 %v991
      %v1239 = vpop.f32.mrb[0].mxu0
      %v1240 = vadd.f32 %v1115, %v1239
      %v1241 = vpop.f32.mrb[0].mxu0
      %1242 = vdwg.mxu0
      %v1243 = vrsqrt.pop %v1205
      %v1244 = vmul.f32 %v1205, %v1243
      %vm1245 = vcmp.eq.f32.partialorder %v1205, inf
      %v1246 = vsel %vm1245, %v1205, %v1244
      %vm1247 = vcmp.eq.f32.partialorder %v1205, 0.0
      %v1248 = vand.u32 %v1205, 2147483648
      %v1249 = vsel %vm1247, %v1248, %v1246
      %v1250 = vrsqrt.pop %v1210
      %v1251 = vmul.f32 %v1210, %v1250
      %vm1252 = vcmp.eq.f32.partialorder %v1210, inf
      %v1253 = vsel %vm1252, %v1210, %v1251
      %vm1254 = vcmp.eq.f32.partialorder %v1210, 0.0
      %v1255 = vand.u32 %v1210, 2147483648
      %v1256 = vsel %vm1254, %v1255, %v1253
      %v1257 = vrsqrt.pop %v1215
      %v1258 = vmul.f32 %v1215, %v1257
      %vm1259 = vcmp.eq.f32.partialorder %v1215, inf
      %v1260 = vsel %vm1259, %v1215, %v1258
      %vm1261 = vcmp.eq.f32.partialorder %v1215, 0.0
      %v1262 = vand.u32 %v1215, 2147483648
      %v1263 = vsel %vm1261, %v1262, %v1260
      %v1264 = vrsqrt.pop %v1220
      %v1265 = vmul.f32 %v1220, %v1264
      %vm1266 = vcmp.eq.f32.partialorder %v1220, inf
      %v1267 = vsel %vm1266, %v1220, %v1265
      %vm1268 = vcmp.eq.f32.partialorder %v1220, 0.0
      %v1269 = vand.u32 %v1220, 2147483648
      %v1270 = vsel %vm1268, %v1269, %v1267
      %v1271 = vrsqrt.pop %v1225
      %v1272 = vmul.f32 %v1225, %v1271
      %vm1273 = vcmp.eq.f32.partialorder %v1225, inf
      %v1274 = vsel %vm1273, %v1225, %v1272
      %vm1275 = vcmp.eq.f32.partialorder %v1225, 0.0
      %v1276 = vand.u32 %v1225, 2147483648
      %v1277 = vsel %vm1275, %v1276, %v1274
      %v1278 = vrsqrt.pop %v1230
      %v1279 = vmul.f32 %v1230, %v1278
      %vm1280 = vcmp.eq.f32.partialorder %v1230, inf
      %v1281 = vsel %vm1280, %v1230, %v1279
      %vm1282 = vcmp.eq.f32.partialorder %v1230, 0.0
      %v1283 = vand.u32 %v1230, 2147483648
      %v1284 = vsel %vm1282, %v1283, %v1281
      %v1285 = vrsqrt.pop %v1235
      %v1286 = vmul.f32 %v1235, %v1285
      %vm1287 = vcmp.eq.f32.partialorder %v1235, inf
      %v1288 = vsel %vm1287, %v1235, %v1286
      %vm1289 = vcmp.eq.f32.partialorder %v1235, 0.0
      %v1290 = vand.u32 %v1235, 2147483648
      %v1291 = vsel %vm1289, %v1290, %v1288
      %v1292 = vrsqrt.pop %v1240
      %v1293 = vmul.f32 %v1240, %v1292
      %vm1294 = vcmp.eq.f32.partialorder %v1240, inf
      %v1295 = vsel %vm1294, %v1240, %v1293
      %vm1296 = vcmp.eq.f32.partialorder %v1240, 0.0
      %v1297 = vand.u32 %v1240, 2147483648
      %v1298 = vsel %vm1296, %v1297, %v1295
      %v1299 = vmul.f32 %v1249, %v1277
      %v1300 = vmul.f32 %v1256, %v1284
      %v1301 = vmul.f32 %v1263, %v1291
      %v1302 = vmul.f32 %v1270, %v1298
      %v1303 = vmax.f32 %v1299, 1e-08
      %v1304 = vmax.f32 %v1300, 1e-08
      %v1305 = vmax.f32 %v1301, 1e-08
      %v1306 = vmax.f32 %v1302, 1e-08
      %v1307 = vrcp.pop %v1303
      %v1308 = vmul.f32 %v1185, %v1307
      %v1309 = vrcp.pop %v1304
      %v1310 = vmul.f32 %v1190, %v1309
      %v1311 = vrcp.pop %v1305
      %v1312 = vmul.f32 %v1195, %v1311
      %v1313 = vrcp.pop %v1306
      %v1314 = vmul.f32 %v1200, %v1313
      %v1315 = vadd.f32 %v1308, %v941
      %v1316 = vadd.f32 %v1310, %v942
      %v1317 = vadd.f32 %v1312, %v943
      %v1318 = vadd.f32 %v1314, %v944
      %v1320 = vlaneseq
      %v1321 = vshrl.u32 %v1320, 7
      %v1322 = vsub.s32 0, %v1321
      %v1323 = vrot.slane %v389, %v1322
      %v1325 = vadd.f32 %v1315, %v1323
      %v1326 = vadd.f32 %v1316, %v1323
      %v1327 = vadd.f32 %v1317, %v1323
      %v1328 = vadd.f32 %v1318, %v1323
      %v1329 = vmax.f32 %v1325, 0.0
      %v1330 = vmax.f32 %v1326, 0.0
      %v1331 = vmax.f32 %v1327, 0.0
      %v1332 = vmax.f32 %v1328, 0.0
      %vm1333 = vcmask 130048
      %1334 = vst.msk [vmem:[%s275] sm:$0xff] %vm1333, %v1329
      %1335 = vst.msk [vmem:[%s275 + $0x8] sm:$0xff] %vm1333, %v1330
      %1336 = vst.msk [vmem:[%s275 + $0x10] sm:$0xff] %vm1333, %v1331
      %1337 = vst.msk [vmem:[%s275 + $0x18] sm:$0xff] %vm1333, %v1332
      %s1338 = smul.u32 4, %s17
      %p1339 = scmp.lt.s32.totalorder %s1338, 7
      %s1340 = scalar_select %p1339, %s1338, 7
      %s1341 = smul.addr %s1340, 8
      %s1342 = scalar_lea.vmem %s6, %s1341
      // Predicated region
      $region45: #{tpu_custom_call.1} parent=43 // pred_check
        %p1343 = pneg %p171
      $region46: #{tpu_custom_call.1} parent=43 // pred_check_branch
        %1345 = sbr.rel (%p1343) target = $region48
      $region47: #{tpu_custom_call.1} parent=43 // pred_region
        %s1346 = smul.u32 4, %s17
      $region48: #{tpu_custom_call.1} parent=43 // pred_fallthru
        _
    $region44: #{tpu_custom_call.1} parent=5 // pred_fallthru
      _
    %p1347 = scmp.le.s32.totalorder 2, %s12
    // Predicated region
    $region49: #{tpu_custom_call.1} parent=5 // pred_check
      %p1348 = pneg %p1347
    $region50: #{tpu_custom_call.1} parent=5 // pred_check_branch
      %1350 = sbr.rel (%p1348) target = $region52
    $region51: #{tpu_custom_call.1} parent=5 // pred_region
      %s1351 = ssub.s32 %s12, 2
      // Predicated region
      $region53: #{tpu_custom_call.1} parent=51 // pred_check
        %p1352 = pneg %p177
      $region54: #{tpu_custom_call.1} parent=51 // pred_check_branch
        %1354 = sbr.rel (%p1352) target = $region56
      $region55: #{tpu_custom_call.1} parent=51 // pred_region
        %s1355 = smul.u32 4, %s18
        %p1356 = scmp.lt.s32.totalorder %s1355, 7
        %s1357 = scalar_select %p1356, %s1355, 7
        %s1358 = smul.addr %s1357, 8
        %s1359 = scalar_lea.vmem %s6, %s1358
      $region56: #{tpu_custom_call.1} parent=51 // pred_fallthru
        _
    $region52: #{tpu_custom_call.1} parent=5 // pred_fallthru
      _
  $region6: #{tpu_custom_call.1} parent=0 // loop_footer
    %s16 = sadd.s32 1, %s12
  $region7: #{tpu_custom_call.1} parent=0 // loop_footer_branch
    %11 = sbr.rel target = $region3
  $region8: #{tpu_custom_call.1} parent=0 // loop_exit
    _

</llo_original>
